<compile_context>
chip_gen: v7x
topology: tpu7x:2x2x1
jax: 0.10.0
libtpu: 0.0.40
codegen_flags: <defaults>
</compile_context>

<pallas_src>
import functools

import jax
import jax.numpy as jnp
from jax.experimental import pallas as pl
from jax.experimental.pallas import tpu as pltpu


def _round_up(x, m):
    return ((x + m - 1) // m) * m


def _vmem_capacity_bytes(default=64 * 1024 * 1024):
    try:
        return int(pltpu.get_tpu_info().vmem_capacity_bytes)
    except Exception:
        return default


def _cosine_loss_kernel(lens_ref, pred_ref, targ_ref, out_ref, p_acc, t_acc,
                        *, k, d, s_fold):
    """Grid = (batch blocks ["parallel"], folded-seq blocks ["arbitrary"]).

    pred_ref/targ_ref: (TB, TS, Df) with Df = k*d (k timesteps folded into
    lanes).  lens_ref: (TB, 1) int32 original-timestep lengths.
    """
    s = pl.program_id(1)

    pred = pred_ref[...].astype(jnp.float32)   # (TB, TS, Df)
    targ = targ_ref[...].astype(jnp.float32)
    tb, ts, df = pred.shape

    # Global folded-seq index per row of the block, and lane index.
    fold_idx = jax.lax.broadcasted_iota(jnp.int32, (ts, df), 0) + s * ts
    lane_idx = jax.lax.broadcasted_iota(jnp.int32, (ts, df), 1)

    # Valid (non-ragged-edge) folded timesteps: fold_idx < S//k  <=>  orig_t < S.
    keep_s = fold_idx < s_fold                                    # (TS, Df) bool

    # target mask: orig_t < lens, with orig_t = fold_idx*k + lane_idx//d.
    # Division-free:  fold_idx*k + lane//d < lens  <=>  lane < (lens - fold_idx*k)*d
    lens = lens_ref[...]                                          # (TB, 1) int32
    keep_t = keep_s[None] & (
        lane_idx[None] < (lens[:, :, None] - fold_idx[None] * k) * d)

    pred_m = jnp.where(keep_s[None], pred, 0.0)
    targ_m = jnp.where(keep_t, targ, 0.0)

    pp = jnp.sum(pred_m, axis=1)                                  # (TB, Df)
    tt = jnp.sum(targ_m, axis=1)

    @pl.when(s == 0)
    def _():
        p_acc[...] = pp
        t_acc[...] = tt

    @pl.when(s > 0)
    def _():
        p_acc[...] += pp
        t_acc[...] += tt

    # Finalize on the last folded-seq step: k-way lane fold, then cosine loss.
    @pl.when(s == pl.num_programs(1) - 1)
    def _():
        pf = p_acc[...]
        tf = t_acc[...]
        p = pf[:, 0:d]
        t = tf[:, 0:d]
        for j in range(1, k):
            p = p + pf[:, j * d:(j + 1) * d]
            t = t + tf[:, j * d:(j + 1) * d]
        dot = jnp.sum(p * t, axis=-1, keepdims=True)              # (TB, 1)
        pn = jnp.sqrt(jnp.sum(p * p, axis=-1, keepdims=True))
        tn = jnp.sqrt(jnp.sum(t * t, axis=-1, keepdims=True))
        denom = jnp.maximum(pn, 1e-8) * jnp.maximum(tn, 1e-8)     # PyTorch eps clamp
        out_ref[...] = 1.0 - dot / denom


def cosine_loss(predicted, target, target_lens, predicted_lens=None, *,
                block_b=8, block_s=None):
    """predicted, target: (B, S, D); target_lens: (B,) int. Returns scalar f32.

    predicted_lens is accepted for API parity with the PyTorch module but is
    unused (the original forward ignores it too).
    block_s (optional) is the folded-sequence tile size hint.
    """
    del predicted_lens
    B, S, D = predicted.shape
    itemsize = jnp.dtype(predicted.dtype).itemsize

    # --- lane folding: pack k consecutive timesteps into lanes when D < 128 --
    k = 1
    if D < 128 and S > 1:
        for cand in range(min(128 // D, S), 1, -1):
            if S % cand == 0:
                k = cand
                break
    S_f, Df = S // k, k * D
    if k > 1:
        # contiguous, layout-preserving reshape: free (no HBM copy)
        predicted = predicted.reshape(B, S_f, Df)
        target = target.reshape(B, S_f, Df)

    # --- batch tile: sublane-friendly, balanced across megacore TCs ----------
    if B < 8:
        block_b = B                                   # block == full batch dim
        b_steps = 1
    else:
        block_b = max(8, _round_up(int(block_b), 8))
        block_b = min(block_b, _round_up(B, 8))
        b_steps = -(-B // block_b)
        # v7x splits the "parallel" axis over 2 TCs: prefer an even step count
        # when the number of batch steps is small and odd.
        if 1 < b_steps <= 8 and b_steps % 2 == 1:
            for cand in range(block_b + 8, min(4 * block_b, _round_up(B, 8)) + 1, 8):
                if (-(-B // cand)) % 2 == 0:
                    block_b = cand
                    b_steps = -(-B // cand)
                    break

    # --- sequence tile: sized against the *padded* VMEM footprint ------------
    sub_q = {4: 8, 2: 16, 1: 32}.get(itemsize, 8)     # sublane quantum per dtype
    vmem_cap = _vmem_capacity_bytes()
    # per-input block cap: ~4 MiB on v7x (64 MiB VMEM), ~8 MiB on v5e/v6e.
    block_cap = max(1 << 20, min(8 << 20, vmem_cap // 16))
    row_pad_bytes = block_b * _round_up(Df, 128) * itemsize   # one folded timestep
    max_s = max(sub_q, (block_cap // max(row_pad_bytes, 1)) // sub_q * sub_q)
    if block_s is not None:
        max_s = min(max_s, max(sub_q, _round_up(int(block_s), sub_q)))
    if max_s >= S_f:
        block_s = S_f                                  # single full-extent block
    else:
        block_s = max_s                                # multiple of sub_q
    s_steps = -(-S_f // block_s)

    lens2d = target_lens.astype(jnp.int32).reshape(B, 1)       # no padding

    kernel = functools.partial(_cosine_loss_kernel, k=k, d=D, s_fold=S_f)
    vmem_limit = min(int(vmem_cap * 3 // 4), 96 * 1024 * 1024)

    out = pl.pallas_call(
        kernel,
        out_shape=jax.ShapeDtypeStruct((B, 1), jnp.float32),
        grid_spec=pltpu.PrefetchScalarGridSpec(
            num_scalar_prefetch=0,
            grid=(b_steps, s_steps),
            in_specs=[
                pl.BlockSpec((block_b, 1), lambda b, s: (b, 0)),
                pl.BlockSpec((block_b, block_s, Df), lambda b, s: (b, s, 0)),
                pl.BlockSpec((block_b, block_s, Df), lambda b, s: (b, s, 0)),
            ],
            out_specs=pl.BlockSpec((block_b, 1), lambda b, s: (b, 0)),
            scratch_shapes=[
                pltpu.VMEM((block_b, Df), jnp.float32),
                pltpu.VMEM((block_b, Df), jnp.float32),
            ],
        ),
        compiler_params=pltpu.CompilerParams(
            dimension_semantics=("parallel", "arbitrary"),
            vmem_limit_bytes=vmem_limit,
        ),
    )(lens2d, predicted, target)

    return jnp.mean(out[:, 0])


def _reference(predicted, target, target_lens):
    B, S, D = predicted.shape
    mask = (jnp.arange(S)[None, :, None] < target_lens[:, None, None])
    targ = jnp.where(mask, target, 0.0)
    p = jnp.sum(predicted, axis=1)
    t = jnp.sum(targ, axis=1)
    pn = jnp.maximum(jnp.linalg.norm(p, axis=-1), 1e-8)
    tn = jnp.maximum(jnp.linalg.norm(t, axis=-1), 1e-8)
    cos = jnp.sum(p * t, -1) / (pn * tn)
    return jnp.mean(1.0 - cos)


# TODO(synk): the original module zeroes `target[i, t:, :]` in place; this
# functional kernel does not mutate its input.

if __name__ == "__main__":
    B, S, D = 20, 40, 32
    key = jax.random.PRNGKey(0)
    k1, k2, k3 = jax.random.split(key, 3)
    predicted = jax.random.normal(k1, (B, S, D), dtype=jnp.float32)
    target = jax.random.normal(k2, (B, S, D), dtype=jnp.float32)
    target_lens = jax.random.randint(k3, (B,), 1, S + 1).astype(jnp.int32)

    # block_s=8 (folded units; k=4, S_f=10) -> grid (2, 2): exercises lane
    # folding, the multi-step sequence reduction, ragged batch and sequence
    # edges, and the megacore-balanced batch grid.
    loss = cosine_loss(predicted, target, target_lens, block_s=8)
    loss = jax.block_until_ready(loss)

    ref = _reference(predicted, target, target_lens)
    assert jnp.allclose(loss, ref, atol=1e-5, rtol=1e-5), (loss, ref)
    print("KERNEL_OK")
</pallas_src>

<mosaic_0001>
module attributes {stable_mosaic.version = 11 : i64} {
  func.func @_cosine_loss_kernel(%arg0: i32, %arg1: i32, %arg2: memref<16x1xi32, #tpu.memory_space<vmem>>, %arg3: memref<16x8x128xf32, #tpu.memory_space<vmem>>, %arg4: memref<16x8x128xf32, #tpu.memory_space<vmem>>, %arg5: memref<16x1xf32, #tpu.memory_space<vmem>>, %arg6: memref<16x128xf32, #tpu.memory_space<vmem>>, %arg7: memref<16x128xf32, #tpu.memory_space<vmem>>) attributes {dimension_semantics = [#tpu.dimension_semantics<parallel>, #tpu.dimension_semantics<arbitrary>], iteration_bounds = array<i64: 2, 2>, scalar_prefetch = 0 : i64, scratch_operands = 2 : i64, tpu.core_type = #tpu.core_type<tc>, window_params = [{transform_indices = @transform_0, window_bounds = array<i64: 16, 1>}, {transform_indices = @transform_1, window_bounds = array<i64: 16, 8, 128>}, {transform_indices = @transform_2, window_bounds = array<i64: 16, 8, 128>}, {transform_indices = @transform_3, window_bounds = array<i64: 16, 1>}]} {
    %c0 = arith.constant 0 : index
    %c0_0 = arith.constant 0 : index
    %c0_1 = arith.constant 0 : index
    %0 = vector.load %arg3[%c0, %c0_0, %c0_1] : memref<16x8x128xf32, #tpu.memory_space<vmem>>, vector<16x8x128xf32>
    %c0_2 = arith.constant 0 : index
    %c0_3 = arith.constant 0 : index
    %c0_4 = arith.constant 0 : index
    %1 = vector.load %arg4[%c0_2, %c0_3, %c0_4] : memref<16x8x128xf32, #tpu.memory_space<vmem>>, vector<16x8x128xf32>
    %2 = tpu.iota {dimensions = array<i32: 0>} : vector<8x128xi32>
    %c8_i32 = arith.constant 8 : i32
    %3 = arith.muli %arg1, %c8_i32 : i32
    %4 = vector.broadcast %3 : i32 to vector<8x128xi32>
    %5 = arith.addi %2, %4 : vector<8x128xi32>
    %6 = tpu.iota {dimensions = array<i32: 1>} : vector<8x128xi32>
    %c10_i32 = arith.constant 10 : i32
    %7 = vector.broadcast %c10_i32 : i32 to vector<8x128xi32>
    %8 = arith.cmpi slt, %5, %7 : vector<8x128xi32>
    %c0_5 = arith.constant 0 : index
    %c0_6 = arith.constant 0 : index
    %9 = vector.load %arg2[%c0_5, %c0_6] : memref<16x1xi32, #tpu.memory_space<vmem>>, vector<16x1xi32>
    %10 = vector.shape_cast %8 : vector<8x128xi1> to vector<1x8x128xi1>
    %11 = vector.shape_cast %6 : vector<8x128xi32> to vector<1x8x128xi32>
    %12 = vector.shape_cast %9 : vector<16x1xi32> to vector<16x1x1xi32>
    %13 = vector.shape_cast %5 : vector<8x128xi32> to vector<1x8x128xi32>
    %c4_i32 = arith.constant 4 : i32
    %14 = vector.broadcast %c4_i32 : i32 to vector<1x8x128xi32>
    %15 = arith.muli %13, %14 : vector<1x8x128xi32>
    %16 = vector.broadcast %12 : vector<16x1x1xi32> to vector<16x8x128xi32>
    %17 = vector.broadcast %15 : vector<1x8x128xi32> to vector<16x8x128xi32>
    %18 = arith.subi %16, %17 : vector<16x8x128xi32>
    %c32_i32 = arith.constant 32 : i32
    %19 = vector.broadcast %c32_i32 : i32 to vector<16x8x128xi32>
    %20 = arith.muli %18, %19 : vector<16x8x128xi32>
    %21 = vector.broadcast %11 : vector<1x8x128xi32> to vector<16x8x128xi32>
    %22 = arith.cmpi slt, %21, %20 : vector<16x8x128xi32>
    %23 = vector.broadcast %10 : vector<1x8x128xi1> to vector<16x8x128xi1>
    %24 = arith.andi %23, %22 : vector<16x8x128xi1>
    %25 = vector.shape_cast %8 : vector<8x128xi1> to vector<1x8x128xi1>
    %cst = arith.constant 0.000000e+00 : f32
    %26 = vector.shape_cast %25 : vector<1x8x128xi1> to vector<1x8x128xi1>
    %27 = vector.broadcast %26 : vector<1x8x128xi1> to vector<16x8x128xi1>
    %28 = vector.broadcast %cst : f32 to vector<16x8x128xf32>
    %29 = arith.select %27, %0, %28 : vector<16x8x128xi1>, vector<16x8x128xf32>
    %cst_7 = arith.constant 0.000000e+00 : f32
    %30 = vector.broadcast %cst_7 : f32 to vector<16x8x128xf32>
    %31 = arith.select %24, %1, %30 : vector<16x8x128xi1>, vector<16x8x128xf32>
    %cst_8 = arith.constant dense<0.000000e+00> : vector<16x128xf32>
    %32 = vector.multi_reduction <add>, %29, %cst_8 [1] : vector<16x8x128xf32> to vector<16x128xf32>
    %cst_9 = arith.constant dense<0.000000e+00> : vector<16x128xf32>
    %33 = vector.multi_reduction <add>, %31, %cst_9 [1] : vector<16x8x128xf32> to vector<16x128xf32>
    %c0_i32 = arith.constant 0 : i32
    %34 = arith.cmpi eq, %arg1, %c0_i32 : i32
    %35 = arith.extui %34 : i1 to i32
    %c0_i32_10 = arith.constant 0 : i32
    %36 = arith.cmpi ne, %35, %c0_i32_10 : i32
    scf.if %36 {
      %c0_14 = arith.constant 0 : index
      %c0_15 = arith.constant 0 : index
      %43 = vector.load %arg6[%c0_14, %c0_15] : memref<16x128xf32, #tpu.memory_space<vmem>>, vector<16x128xf32>
      tpu.vector_store %arg6[%c0_14, %c0_15], %32 {strides = array<i32>} : memref<16x128xf32, #tpu.memory_space<vmem>>, vector<16x128xf32>,
      %c0_16 = arith.constant 0 : index
      %c0_17 = arith.constant 0 : index
      %44 = vector.load %arg7[%c0_16, %c0_17] : memref<16x128xf32, #tpu.memory_space<vmem>>, vector<16x128xf32>
      tpu.vector_store %arg7[%c0_16, %c0_17], %33 {strides = array<i32>} : memref<16x128xf32, #tpu.memory_space<vmem>>, vector<16x128xf32>,
    } else {
    }
    %c0_i32_11 = arith.constant 0 : i32
    %37 = arith.cmpi sgt, %arg1, %c0_i32_11 : i32
    %38 = arith.extui %37 : i1 to i32
    %c0_i32_12 = arith.constant 0 : i32
    %39 = arith.cmpi ne, %38, %c0_i32_12 : i32
    scf.if %39 {
      %c0_14 = arith.constant 0 : index
      %c0_15 = arith.constant 0 : index
      %43 = vector.load %arg6[%c0_14, %c0_15] : memref<16x128xf32, #tpu.memory_space<vmem>>, vector<16x128xf32>
      %44 = arith.addf %43, %32 : vector<16x128xf32>
      %c0_16 = arith.constant 0 : index
      %c0_17 = arith.constant 0 : index
      %45 = vector.load %arg6[%c0_16, %c0_17] : memref<16x128xf32, #tpu.memory_space<vmem>>, vector<16x128xf32>
      tpu.vector_store %arg6[%c0_16, %c0_17], %44 {strides = array<i32>} : memref<16x128xf32, #tpu.memory_space<vmem>>, vector<16x128xf32>,
      %c0_18 = arith.constant 0 : index
      %c0_19 = arith.constant 0 : index
      %46 = vector.load %arg7[%c0_18, %c0_19] : memref<16x128xf32, #tpu.memory_space<vmem>>, vector<16x128xf32>
      %47 = arith.addf %46, %33 : vector<16x128xf32>
      %c0_20 = arith.constant 0 : index
      %c0_21 = arith.constant 0 : index
      %48 = vector.load %arg7[%c0_20, %c0_21] : memref<16x128xf32, #tpu.memory_space<vmem>>, vector<16x128xf32>
      tpu.vector_store %arg7[%c0_20, %c0_21], %47 {strides = array<i32>} : memref<16x128xf32, #tpu.memory_space<vmem>>, vector<16x128xf32>,
    } else {
    }
    %c1_i32 = arith.constant 1 : i32
    %40 = arith.cmpi eq, %arg1, %c1_i32 : i32
    %41 = arith.extui %40 : i1 to i32
    %c0_i32_13 = arith.constant 0 : i32
    %42 = arith.cmpi ne, %41, %c0_i32_13 : i32
    scf.if %42 {
      %c0_14 = arith.constant 0 : index
      %c0_15 = arith.constant 0 : index
      %43 = vector.load %arg6[%c0_14, %c0_15] : memref<16x128xf32, #tpu.memory_space<vmem>>, vector<16x128xf32>
      %c0_16 = arith.constant 0 : index
      %c0_17 = arith.constant 0 : index
      %44 = vector.load %arg7[%c0_16, %c0_17] : memref<16x128xf32, #tpu.memory_space<vmem>>, vector<16x128xf32>
      %45 = vector.extract_strided_slice %43 {offsets = [0, 0], sizes = [16, 32], strides = [1, 1]} : vector<16x128xf32> to vector<16x32xf32>
      %46 = vector.extract_strided_slice %44 {offsets = [0, 0], sizes = [16, 32], strides = [1, 1]} : vector<16x128xf32> to vector<16x32xf32>
      %47 = vector.extract_strided_slice %43 {offsets = [0, 32], sizes = [16, 32], strides = [1, 1]} : vector<16x128xf32> to vector<16x32xf32>
      %48 = arith.addf %45, %47 : vector<16x32xf32>
      %49 = vector.extract_strided_slice %44 {offsets = [0, 32], sizes = [16, 32], strides = [1, 1]} : vector<16x128xf32> to vector<16x32xf32>
      %50 = arith.addf %46, %49 : vector<16x32xf32>
      %51 = vector.extract_strided_slice %43 {offsets = [0, 64], sizes = [16, 32], strides = [1, 1]} : vector<16x128xf32> to vector<16x32xf32>
      %52 = arith.addf %48, %51 : vector<16x32xf32>
      %53 = vector.extract_strided_slice %44 {offsets = [0, 64], sizes = [16, 32], strides = [1, 1]} : vector<16x128xf32> to vector<16x32xf32>
      %54 = arith.addf %50, %53 : vector<16x32xf32>
      %55 = vector.extract_strided_slice %43 {offsets = [0, 96], sizes = [16, 32], strides = [1, 1]} : vector<16x128xf32> to vector<16x32xf32>
      %56 = arith.addf %52, %55 : vector<16x32xf32>
      %57 = vector.extract_strided_slice %44 {offsets = [0, 96], sizes = [16, 32], strides = [1, 1]} : vector<16x128xf32> to vector<16x32xf32>
      %58 = arith.addf %54, %57 : vector<16x32xf32>
      %59 = arith.mulf %56, %58 : vector<16x32xf32>
      %cst_18 = arith.constant dense<0.000000e+00> : vector<16xf32>
      %60 = vector.multi_reduction <add>, %59, %cst_18 [1] : vector<16x32xf32> to vector<16xf32>
      %61 = vector.shape_cast %60 : vector<16xf32> to vector<16x1xf32>
      %62 = arith.mulf %56, %56 : vector<16x32xf32>
      %cst_19 = arith.constant dense<0.000000e+00> : vector<16xf32>
      %63 = vector.multi_reduction <add>, %62, %cst_19 [1] : vector<16x32xf32> to vector<16xf32>
      %64 = vector.shape_cast %63 : vector<16xf32> to vector<16x1xf32>
      %65 = math.sqrt %64 : vector<16x1xf32>
      %66 = arith.mulf %58, %58 : vector<16x32xf32>
      %cst_20 = arith.constant dense<0.000000e+00> : vector<16xf32>
      %67 = vector.multi_reduction <add>, %66, %cst_20 [1] : vector<16x32xf32> to vector<16xf32>
      %68 = vector.shape_cast %67 : vector<16xf32> to vector<16x1xf32>
      %69 = math.sqrt %68 : vector<16x1xf32>
      %cst_21 = arith.constant 9.99999993E-9 : f32
      %70 = vector.broadcast %cst_21 : f32 to vector<16x1xf32>
      %71 = arith.maximumf %65, %70 : vector<16x1xf32>
      %cst_22 = arith.constant 9.99999993E-9 : f32
      %72 = vector.broadcast %cst_22 : f32 to vector<16x1xf32>
      %73 = arith.maximumf %69, %72 : vector<16x1xf32>
      %74 = arith.mulf %71, %73 : vector<16x1xf32>
      %75 = arith.divf %61, %74 : vector<16x1xf32>
      %cst_23 = arith.constant 1.000000e+00 : f32
      %76 = vector.broadcast %cst_23 : f32 to vector<16x1xf32>
      %77 = arith.subf %76, %75 : vector<16x1xf32>
      %c0_24 = arith.constant 0 : index
      %c0_25 = arith.constant 0 : index
      %78 = vector.load %arg5[%c0_24, %c0_25] : memref<16x1xf32, #tpu.memory_space<vmem>>, vector<16x1xf32>
      tpu.vector_store %arg5[%c0_24, %c0_25], %77 {strides = array<i32>} : memref<16x1xf32, #tpu.memory_space<vmem>>, vector<16x1xf32>,
    } else {
    }
    return
  }
  func.func @transform_0(%arg0: i32, %arg1: i32) -> (i32, i32) {
    %c0_i32 = arith.constant 0 : i32
    %c0_i32_0 = arith.constant 0 : i32
    return %arg0, %c0_i32 : i32, i32
  }
  func.func @transform_1(%arg0: i32, %arg1: i32) -> (i32, i32, i32) {
    %c0_i32 = arith.constant 0 : i32
    %c0_i32_0 = arith.constant 0 : i32
    return %arg0, %arg1, %c0_i32 : i32, i32, i32
  }
  func.func @transform_2(%arg0: i32, %arg1: i32) -> (i32, i32, i32) {
    %c0_i32 = arith.constant 0 : i32
    %c0_i32_0 = arith.constant 0 : i32
    return %arg0, %arg1, %c0_i32 : i32, i32, i32
  }
  func.func @transform_3(%arg0: i32, %arg1: i32) -> (i32, i32) {
    %c0_i32 = arith.constant 0 : i32
    %c0_i32_0 = arith.constant 0 : i32
    return %arg0, %c0_i32 : i32, i32
  }
}

</mosaic_0001>

<llo_original>
// kernel: tpu_custom_call.1
$region0: #{tpu_custom_call.1}
  #allocation0 [shape = 'u32[]', space=smem, size = 0x4, offset = 0x4, fixed_abs, tag = 'smem constant byte address 0x4 - core index']
  #allocation1 [shape = 'u32[144,128]{1,0:T(1,128)}', space=vmem, size = 0x12000, scoped, tag = 'internal scratch']
  #allocation2 [shape = 'f32[16,128]{1,0:T(8,128)}', space=vmem, size = 0x2000, scoped, tag = 'scratch operand']
  #allocation3 [shape = 'f32[16,128]{1,0:T(8,128)}', space=vmem, size = 0x2000, scoped, tag = 'scratch operand']
  %s0 = inlined_call_operand.vmem [shape: s32[20,1], index: 0, kind: input, shape index: {}]
  %s1 = inlined_call_operand.vmem [shape: f32[20,10,128], index: 1, kind: input, shape index: {}]
  %s2 = inlined_call_operand.vmem [shape: f32[20,10,128], index: 2, kind: input, shape index: {}]
  %s3 = inlined_call_operand.vmem [shape: f32[20,1], index: 3, kind: output, shape index: {}]
  %s4 = sld [smem:[#allocation0]]
  $region209: #{tpu_custom_call.1} parent=0
    _
  %s6 = ssub.s32 1, %s4
  %s7 = scalar_select 0, %s6, %s4
  $region1: #{tpu_custom_call.1} parent=0
    #allocation4 [shape = 'u8[131072]{0}', space=vmem, size = 0x20000, scoped, tag = 'input window, operand 1']
    #allocation5 [shape = 'u8[131072]{0}', space=vmem, size = 0x20000, scoped, tag = 'input window, operand 2']
    #allocation6 [shape = 'u8[16384]{0}', space=vmem, size = 0x4000, scoped, tag = 'output window, operand 0']
    loop: start=0, step=1, limit=6
    $region2: #{tpu_custom_call.1} parent=1 // loop_pre_header
      _
    $region3: #{tpu_custom_call.1} parent=1 // loop_header
      %s9 = sphi 0, %s13
      %p10 = scmp.ge.s32.totalorder %s9, 6
      %s16 = sphi 0, %s28
      %s17 = sphi 0, %s24
      %s18 = sphi 0, %s16
      %s19 = sphi 0, %s17
      %s20 = sphi 0, %s18
      %s21 = sphi 0, %s19
      %s31 = sphi 0, %s33
      %s34 = sphi 0, %s31
      %s35 = sphi 0, %s34
      %s51 = sphi 0, %s35
      %s59 = sphi 0, %s61
      %s62 = sphi 0, %s59
      %s63 = sphi 0, %s62
      %s79 = sphi 0, %s63
      %s87 = sphi 0, %s89
      %s90 = sphi 0, %s87
      %s91 = sphi 0, %s90
      %s107 = sphi 0, %s91
      %s113 = sphi 0, %s115
      %s116 = sphi 0, %s113
      %s117 = sphi 0, %s116
      %s133 = sphi 0, %s117
    $region4: #{tpu_custom_call.1} parent=1 // loop_header_branch
      %12 = sbr.rel (%p10) target = $region8
    $region5: #{tpu_custom_call.1} parent=1 // loop_body
      %s14 = ssub.s32 %s9, 1
      %s15 = ssub.s32 %s9, 2
      %s22 = sadd.s32 1, %s17
      %p23 = scmp.ge.s32.totalorder %s22, 2
      %s24 = scalar_select %p23, 0, %s22
      %s25 = sadd.s32 1, %s16
      %s26 = scalar_select %p23, %s25, %s16
      %p27 = scmp.ge.s32.totalorder %s26, 2
      %s28 = scalar_select %p27, 0, %s26
      %s29 = ssub.s32 %s16, %s28
      %p30 = scmp.eq.s32.totalorder %s29, 0
      %s32 = sadd.s32 %s31, 1
      %s33 = scalar_select %p30, %s31, %s32
      %p36 = pneg %p30
      %p37 = scmp.eq.s32.totalorder %s9, 3
      %p38 = por %p36, %p37
      %p39 = scmp.ne.s32.totalorder %s31, %s34
      %p40 = scmp.eq.s32.totalorder %s9, 0
      %p41 = por %p39, %p40
      %p42 = scmp.ne.s32.totalorder %s31, %s34
      %p43 = scmp.eq.s32.totalorder %s14, 3
      %p44 = por %p42, %p43
      %p45 = scmp.ne.s32.totalorder %s34, %s35
      %p46 = scmp.eq.s32.totalorder %s14, 0
      %p47 = por %p45, %p46
      %p48 = scmp.ne.s32.totalorder %s34, %s35
      %p49 = scmp.eq.s32.totalorder %s15, 3
      %p50 = por %p48, %p49
      %p52 = scmp.ne.s32.totalorder %s35, %s51
      %p53 = scmp.eq.s32.totalorder %s15, 0
      %p54 = por %p52, %p53
      %s55 = ssub.s32 %s16, %s28
      %s56 = ssub.s32 %s17, %s24
      %s57 = sor.u32 %s55, %s56
      %p58 = scmp.eq.s32.totalorder %s57, 0
      %s60 = sadd.s32 %s59, 1
      %s61 = scalar_select %p58, %s59, %s60
      %p64 = pneg %p58
      %p65 = scmp.eq.s32.totalorder %s9, 3
      %p66 = por %p64, %p65
      %p67 = scmp.ne.s32.totalorder %s59, %s62
      %p68 = scmp.eq.s32.totalorder %s9, 0
      %p69 = por %p67, %p68
      %p70 = scmp.ne.s32.totalorder %s59, %s62
      %p71 = scmp.eq.s32.totalorder %s14, 3
      %p72 = por %p70, %p71
      %p73 = scmp.ne.s32.totalorder %s62, %s63
      %p74 = scmp.eq.s32.totalorder %s14, 0
      %p75 = por %p73, %p74
      %p76 = scmp.ne.s32.totalorder %s62, %s63
      %p77 = scmp.eq.s32.totalorder %s15, 3
      %p78 = por %p76, %p77
      %p80 = scmp.ne.s32.totalorder %s63, %s79
      %p81 = scmp.eq.s32.totalorder %s15, 0
      %p82 = por %p80, %p81
      %s83 = ssub.s32 %s16, %s28
      %s84 = ssub.s32 %s17, %s24
      %s85 = sor.u32 %s83, %s84
      %p86 = scmp.eq.s32.totalorder %s85, 0
      %s88 = sadd.s32 %s87, 1
      %s89 = scalar_select %p86, %s87, %s88
      %p92 = pneg %p86
      %p93 = scmp.eq.s32.totalorder %s9, 3
      %p94 = por %p92, %p93
      %p95 = scmp.ne.s32.totalorder %s87, %s90
      %p96 = scmp.eq.s32.totalorder %s9, 0
      %p97 = por %p95, %p96
      %p98 = scmp.ne.s32.totalorder %s87, %s90
      %p99 = scmp.eq.s32.totalorder %s14, 3
      %p100 = por %p98, %p99
      %p101 = scmp.ne.s32.totalorder %s90, %s91
      %p102 = scmp.eq.s32.totalorder %s14, 0
      %p103 = por %p101, %p102
      %p104 = scmp.ne.s32.totalorder %s90, %s91
      %p105 = scmp.eq.s32.totalorder %s15, 3
      %p106 = por %p104, %p105
      %p108 = scmp.ne.s32.totalorder %s91, %s107
      %p109 = scmp.eq.s32.totalorder %s15, 0
      %p110 = por %p108, %p109
      %s111 = ssub.s32 %s16, %s28
      %p112 = scmp.eq.s32.totalorder %s111, 0
      %s114 = sadd.s32 %s113, 1
      %s115 = scalar_select %p112, %s113, %s114
      %p118 = pneg %p112
      %p119 = scmp.eq.s32.totalorder %s9, 3
      %p120 = por %p118, %p119
      %p121 = scmp.ne.s32.totalorder %s113, %s116
      %p122 = scmp.eq.s32.totalorder %s9, 0
      %p123 = por %p121, %p122
      %p124 = scmp.ne.s32.totalorder %s113, %s116
      %p125 = scmp.eq.s32.totalorder %s14, 3
      %p126 = por %p124, %p125
      %p127 = scmp.ne.s32.totalorder %s116, %s117
      %p128 = scmp.eq.s32.totalorder %s14, 0
      %p129 = por %p127, %p128
      %p130 = scmp.ne.s32.totalorder %s116, %s117
      %p131 = scmp.eq.s32.totalorder %s15, 3
      %p132 = por %p130, %p131
      %p134 = scmp.ne.s32.totalorder %s117, %s133
      %p135 = scmp.eq.s32.totalorder %s15, 0
      %p136 = por %p134, %p135
      %p137 = scmp.le.s32.totalorder 1, %s9
      %p138 = scmp.lt.s32.totalorder %s9, 5
      %p139 = pnand %p137, %p138
      %p140 = pneg %p139
      // Predicated region
      $region9: #{tpu_custom_call.1} parent=5 // pred_check
        _
      $region10: #{tpu_custom_call.1} parent=5 // pred_check_branch
        %142 = sbr.rel (%p139) target = $region12
      $region11: #{tpu_custom_call.1} parent=5 // pred_region
        %s143 = ssub.s32 %s9, 1
      $region12: #{tpu_custom_call.1} parent=5 // pred_fallthru
        _
      %p144 = scmp.lt.s32.totalorder %s9, 4
      // Predicated region
      $region13: #{tpu_custom_call.1} parent=5 // pred_check
        %p145 = pneg %p144
      $region14: #{tpu_custom_call.1} parent=5 // pred_check_branch
        %147 = sbr.rel (%p145) target = $region16
      $region15: #{tpu_custom_call.1} parent=5 // pred_region
        // Predicated region
        $region17: #{tpu_custom_call.1} parent=15 // pred_check
          %p148 = pneg %p41
        $region18: #{tpu_custom_call.1} parent=15 // pred_check_branch
          %150 = sbr.rel (%p148) target = $region20
        $region19: #{tpu_custom_call.1} parent=15 // pred_region
          %s151 = smul.u32 2, %s16
          %s152 = ssub.s32 3, %s151
          %p153 = scmp.lt.s32.totalorder %s152, 2
          %s154 = scalar_select %p153, %s152, 2
          %s155 = smul.u32 128, %s154
          %p156 = scmp.lt.s32.totalorder %s151, 2
          %s157 = scalar_select %p156, %s151, 2
          %s158 = smul.addr %s157, 8
          %s159 = scalar_lea.vmem %s0, %s158
          %s160 = smul.u32 2, %s16
          %s161 = ssub.s32 3, %s160
          %p162 = scmp.lt.s32.totalorder %s161, 2
          %s163 = scalar_select %p162, %s161, 2
          %s164 = smul.u32 128, %s163
        $region20: #{tpu_custom_call.1} parent=15 // pred_fallthru
          _
        // Predicated region
        $region21: #{tpu_custom_call.1} parent=15 // pred_check
          %p165 = pneg %p69
        $region22: #{tpu_custom_call.1} parent=15 // pred_check_branch
          %167 = sbr.rel (%p165) target = $region24
        $region23: #{tpu_custom_call.1} parent=15 // pred_region
          %s168 = sand.u32 %s59, 1
          %s169 = sand.u32 %s59, 1
          %s170 = smul.addr %s169, 128
          %s171 = scalar_lea.vmem [#allocation4], %s170
          %s172 = smul.u32 16, %s16
          %s173 = ssub.s32 20, %s172
          %p174 = scmp.lt.s32.totalorder %s173, 16
          %s175 = scalar_select %p174, %s173, 16
          %s176 = smul.u32 128, %s175
          %p177 = scmp.ne.s32.totalorder 0, %s176
          %s178 = smul.addr %s172, 2
          %s179 = sadd.s32 %s17, %s178
          %s180 = smul.addr %s179, 8
          %s181 = scalar_lea.vmem %s1, %s180
          // Predicated region
          $region25: #{tpu_custom_call.1} parent=23 // pred_check
            %p182 = pneg %p177
          $region26: #{tpu_custom_call.1} parent=23 // pred_check_branch
            %184 = sbr.rel (%p182) target = $region28
          $region27: #{tpu_custom_call.1} parent=23 // pred_region
            // Predicated region
            $region29: #{tpu_custom_call.1} parent=27 // pred_check
              _
            $region30: #{tpu_custom_call.1} parent=27 // pred_check_branch
              %186 = sbr.rel (0) target = $region32
            $region31: #{tpu_custom_call.1} parent=27 // pred_region
              // Predicated region
              $region51: #{tpu_custom_call.1} parent=31 // pred_check
                _
              $region52: #{tpu_custom_call.1} parent=31 // pred_check_branch
                %265 = sbr.rel (0) target = $region54
              $region53: #{tpu_custom_call.1} parent=31 // pred_region
                %s266 = sshrl.u32 %s175, 4
                // While loop
                $region55: #{tpu_custom_call.1} parent=53 // loop_pre_header
                  _
                $region56: #{tpu_custom_call.1} parent=53 // loop_header
                  %s268 = sphi 0, %s270
                  %p269 = scmp.ge.s32.totalorder %s268, %s266
                  %s273 = sphi 0, %s310
                  %s274 = sphi %s181, %s313
                  %s275 = sphi %s171, %s314
                $region57: #{tpu_custom_call.1} parent=53 // loop_header_branch
                  %272 = sbr.rel (%p269) target = $region61
                $region58: #{tpu_custom_call.1} parent=53 // loop_body
                  %v276 = vld [vmem:[%s274] sm:$0xff]
                  %277 = vst [vmem:[%s275] sm:$0xff] %v276
                  %v278 = vld [vmem:[%s274 + $0x10] sm:$0xff]
                  %279 = vst [vmem:[%s275 + $0x8] sm:$0xff] %v278
                  %v280 = vld [vmem:[%s274 + $0x20] sm:$0xff]
                  %281 = vst [vmem:[%s275 + $0x10] sm:$0xff] %v280
                  %v282 = vld [vmem:[%s274 + $0x30] sm:$0xff]
                  %283 = vst [vmem:[%s275 + $0x18] sm:$0xff] %v282
                  %v284 = vld [vmem:[%s274 + $0x40] sm:$0xff]
                  %285 = vst [vmem:[%s275 + $0x20] sm:$0xff] %v284
                  %v286 = vld [vmem:[%s274 + $0x50] sm:$0xff]
                  %287 = vst [vmem:[%s275 + $0x28] sm:$0xff] %v286
                  %v288 = vld [vmem:[%s274 + $0x60] sm:$0xff]
                  %289 = vst [vmem:[%s275 + $0x30] sm:$0xff] %v288
                  %v290 = vld [vmem:[%s274 + $0x70] sm:$0xff]
                  %291 = vst [vmem:[%s275 + $0x38] sm:$0xff] %v290
                  %v292 = vld [vmem:[%s274 + $0x80] sm:$0xff]
                  %293 = vst [vmem:[%s275 + $0x40] sm:$0xff] %v292
                  %v294 = vld [vmem:[%s274 + $0x90] sm:$0xff]
                  %295 = vst [vmem:[%s275 + $0x48] sm:$0xff] %v294
                  %v296 = vld [vmem:[%s274 + $0xa0] sm:$0xff]
                  %297 = vst [vmem:[%s275 + $0x50] sm:$0xff] %v296
                  %v298 = vld [vmem:[%s274 + $0xb0] sm:$0xff]
                  %299 = vst [vmem:[%s275 + $0x58] sm:$0xff] %v298
                  %v300 = vld [vmem:[%s274 + $0xc0] sm:$0xff]
                  %301 = vst [vmem:[%s275 + $0x60] sm:$0xff] %v300
                  %v302 = vld [vmem:[%s274 + $0xd0] sm:$0xff]
                  %303 = vst [vmem:[%s275 + $0x68] sm:$0xff] %v302
                  %v304 = vld [vmem:[%s274 + $0xe0] sm:$0xff]
                  %305 = vst [vmem:[%s275 + $0x70] sm:$0xff] %v304
                  %v306 = vld [vmem:[%s274 + $0xf0] sm:$0xff]
                  %307 = vst [vmem:[%s275 + $0x78] sm:$0xff] %v306
                  %s308 = sadd.s32 1, %s273
                  %p309 = scmp.ge.s32.totalorder %s308, %s266
                  %s310 = scalar_select %p309, 0, %s308
                  %s311 = smul.u32 %s310, 256
                  %s312 = smul.u32 %s310, 128
                  %s313 = scalar_lea.vmem %s181, %s311
                  %s314 = scalar_lea.vmem %s171, %s312 [#allocation4]
                $region59: #{tpu_custom_call.1} parent=53 // loop_footer
                  %s270 = sadd.s32 %s268, 1
                $region60: #{tpu_custom_call.1} parent=53 // loop_footer_branch
                  %267 = sbr.rel target = $region56
                $region61: #{tpu_custom_call.1} parent=53 // loop_exit
                  _
                %s315 = sshrl.u32 %s175, 4
                %s316 = sand.u32 %s175, 15
                %s317 = smul.u32 %s315, 16
                %s318 = smul.u32 16, %s317
                %s319 = scalar_lea.vmem %s181, %s318
                %s320 = smul.u32 8, %s317
                %s321 = scalar_lea.vmem %s171, %s320 [#allocation4]
                // While loop
                $region62: #{tpu_custom_call.1} parent=53 // loop_pre_header
                  _
                $region63: #{tpu_custom_call.1} parent=53 // loop_header
                  %s323 = sphi 0, %s325
                  %p324 = scmp.ge.s32.totalorder %s323, %s316
                  %s328 = sphi 0, %s335
                  %s329 = sphi %s319, %s338
                  %s330 = sphi %s321, %s339
                $region64: #{tpu_custom_call.1} parent=53 // loop_header_branch
                  %327 = sbr.rel (%p324) target = $region68
                $region65: #{tpu_custom_call.1} parent=53 // loop_body
                  %v331 = vld [vmem:[%s329] sm:$0xff]
                  %332 = vst [vmem:[%s330] sm:$0xff] %v331
                  %s333 = sadd.s32 1, %s328
                  %p334 = scmp.ge.s32.totalorder %s333, %s316
                  %s335 = scalar_select %p334, 0, %s333
                  %s336 = smul.u32 %s335, 16
                  %s337 = smul.u32 %s335, 8
                  %s338 = scalar_lea.vmem %s319, %s336
                  %s339 = scalar_lea.vmem %s321, %s337 [#allocation4]
                $region66: #{tpu_custom_call.1} parent=53 // loop_footer
                  %s325 = sadd.s32 %s323, 1
                $region67: #{tpu_custom_call.1} parent=53 // loop_footer_branch
                  %322 = sbr.rel target = $region63
                $region68: #{tpu_custom_call.1} parent=53 // loop_exit
                  _
              $region54: #{tpu_custom_call.1} parent=31 // pred_fallthru
                _
              // Predicated region
              $region69: #{tpu_custom_call.1} parent=31 // pred_check
                _
              $region70: #{tpu_custom_call.1} parent=31 // pred_check_branch
                %341 = sbr.rel target = $region72
              $region71: #{tpu_custom_call.1} parent=31 // pred_region
                _
              $region72: #{tpu_custom_call.1} parent=31 // pred_fallthru
                _
            $region32: #{tpu_custom_call.1} parent=27 // pred_fallthru
              _
            // Predicated region
            $region33: #{tpu_custom_call.1} parent=27 // pred_check
              _
            $region34: #{tpu_custom_call.1} parent=27 // pred_check_branch
              %188 = sbr.rel target = $region36
            $region35: #{tpu_custom_call.1} parent=27 // pred_region
              %s190 = sshrl.u32 %s175, 4
              // While loop
              $region37: #{tpu_custom_call.1} parent=35 // loop_pre_header
                _
              $region38: #{tpu_custom_call.1} parent=35 // loop_header
                %s192 = sphi 0, %s194
                %p193 = scmp.ge.s32.totalorder %s192, %s190
                %s197 = sphi 0, %s234
                %s198 = sphi %s181, %s237
                %s199 = sphi %s171, %s238
              $region39: #{tpu_custom_call.1} parent=35 // loop_header_branch
                %196 = sbr.rel (%p193) target = $region43
              $region40: #{tpu_custom_call.1} parent=35 // loop_body
                %v200 = vld [vmem:[%s198] sm:$0xff]
                %201 = vst [vmem:[%s199] sm:$0xff] %v200
                %v202 = vld [vmem:[%s198 + $0x10] sm:$0xff]
                %203 = vst [vmem:[%s199 + $0x8] sm:$0xff] %v202
                %v204 = vld [vmem:[%s198 + $0x20] sm:$0xff]
                %205 = vst [vmem:[%s199 + $0x10] sm:$0xff] %v204
                %v206 = vld [vmem:[%s198 + $0x30] sm:$0xff]
                %207 = vst [vmem:[%s199 + $0x18] sm:$0xff] %v206
                %v208 = vld [vmem:[%s198 + $0x40] sm:$0xff]
                %209 = vst [vmem:[%s199 + $0x20] sm:$0xff] %v208
                %v210 = vld [vmem:[%s198 + $0x50] sm:$0xff]
                %211 = vst [vmem:[%s199 + $0x28] sm:$0xff] %v210
                %v212 = vld [vmem:[%s198 + $0x60] sm:$0xff]
                %213 = vst [vmem:[%s199 + $0x30] sm:$0xff] %v212
                %v214 = vld [vmem:[%s198 + $0x70] sm:$0xff]
                %215 = vst [vmem:[%s199 + $0x38] sm:$0xff] %v214
                %v216 = vld [vmem:[%s198 + $0x80] sm:$0xff]
                %217 = vst [vmem:[%s199 + $0x40] sm:$0xff] %v216
                %v218 = vld [vmem:[%s198 + $0x90] sm:$0xff]
                %219 = vst [vmem:[%s199 + $0x48] sm:$0xff] %v218
                %v220 = vld [vmem:[%s198 + $0xa0] sm:$0xff]
                %221 = vst [vmem:[%s199 + $0x50] sm:$0xff] %v220
                %v222 = vld [vmem:[%s198 + $0xb0] sm:$0xff]
                %223 = vst [vmem:[%s199 + $0x58] sm:$0xff] %v222
                %v224 = vld [vmem:[%s198 + $0xc0] sm:$0xff]
                %225 = vst [vmem:[%s199 + $0x60] sm:$0xff] %v224
                %v226 = vld [vmem:[%s198 + $0xd0] sm:$0xff]
                %227 = vst [vmem:[%s199 + $0x68] sm:$0xff] %v226
                %v228 = vld [vmem:[%s198 + $0xe0] sm:$0xff]
                %229 = vst [vmem:[%s199 + $0x70] sm:$0xff] %v228
                %v230 = vld [vmem:[%s198 + $0xf0] sm:$0xff]
                %231 = vst [vmem:[%s199 + $0x78] sm:$0xff] %v230
                %s232 = sadd.s32 1, %s197
                %p233 = scmp.ge.s32.totalorder %s232, %s190
                %s234 = scalar_select %p233, 0, %s232
                %s235 = smul.u32 %s234, 256
                %s236 = smul.u32 %s234, 128
                %s237 = scalar_lea.vmem %s181, %s235
                %s238 = scalar_lea.vmem %s171, %s236 [#allocation4]
              $region41: #{tpu_custom_call.1} parent=35 // loop_footer
                %s194 = sadd.s32 %s192, 1
              $region42: #{tpu_custom_call.1} parent=35 // loop_footer_branch
                %191 = sbr.rel target = $region38
              $region43: #{tpu_custom_call.1} parent=35 // loop_exit
                _
              %s239 = sshrl.u32 %s175, 4
              %s240 = sand.u32 %s175, 15
              %s241 = smul.u32 %s239, 16
              %s242 = smul.u32 16, %s241
              %s243 = scalar_lea.vmem %s181, %s242
              %s244 = smul.u32 8, %s241
              %s245 = scalar_lea.vmem %s171, %s244 [#allocation4]
              // While loop
              $region44: #{tpu_custom_call.1} parent=35 // loop_pre_header
                _
              $region45: #{tpu_custom_call.1} parent=35 // loop_header
                %s247 = sphi 0, %s249
                %p248 = scmp.ge.s32.totalorder %s247, %s240
                %s252 = sphi 0, %s259
                %s253 = sphi %s243, %s262
                %s254 = sphi %s245, %s263
              $region46: #{tpu_custom_call.1} parent=35 // loop_header_branch
                %251 = sbr.rel (%p248) target = $region50
              $region47: #{tpu_custom_call.1} parent=35 // loop_body
                %v255 = vld [vmem:[%s253] sm:$0xff]
                %256 = vst [vmem:[%s254] sm:$0xff] %v255
                %s257 = sadd.s32 1, %s252
                %p258 = scmp.ge.s32.totalorder %s257, %s240
                %s259 = scalar_select %p258, 0, %s257
                %s260 = smul.u32 %s259, 16
                %s261 = smul.u32 %s259, 8
                %s262 = scalar_lea.vmem %s243, %s260
                %s263 = scalar_lea.vmem %s245, %s261 [#allocation4]
              $region48: #{tpu_custom_call.1} parent=35 // loop_footer
                %s249 = sadd.s32 %s247, 1
              $region49: #{tpu_custom_call.1} parent=35 // loop_footer_branch
                %246 = sbr.rel target = $region45
              $region50: #{tpu_custom_call.1} parent=35 // loop_exit
                _
            $region36: #{tpu_custom_call.1} parent=27 // pred_fallthru
              _
          $region28: #{tpu_custom_call.1} parent=23 // pred_fallthru
            _
          %342 = vnop
        $region24: #{tpu_custom_call.1} parent=15 // pred_fallthru
          _
        // Predicated region
        $region73: #{tpu_custom_call.1} parent=15 // pred_check
          %p343 = pneg %p97
        $region74: #{tpu_custom_call.1} parent=15 // pred_check_branch
          %345 = sbr.rel (%p343) target = $region76
        $region75: #{tpu_custom_call.1} parent=15 // pred_region
          %s346 = sand.u32 %s87, 1
          %s347 = sand.u32 %s87, 1
          %s348 = smul.addr %s347, 128
          %s349 = scalar_lea.vmem [#allocation5], %s348
          %s350 = smul.u32 16, %s16
          %s351 = ssub.s32 20, %s350
          %p352 = scmp.lt.s32.totalorder %s351, 16
          %s353 = scalar_select %p352, %s351, 16
          %s354 = smul.u32 128, %s353
          %p355 = scmp.ne.s32.totalorder 0, %s354
          %s356 = smul.addr %s350, 2
          %s357 = sadd.s32 %s17, %s356
          %s358 = smul.addr %s357, 8
          %s359 = scalar_lea.vmem %s2, %s358
          // Predicated region
          $region77: #{tpu_custom_call.1} parent=75 // pred_check
            %p360 = pneg %p355
          $region78: #{tpu_custom_call.1} parent=75 // pred_check_branch
            %362 = sbr.rel (%p360) target = $region80
          $region79: #{tpu_custom_call.1} parent=75 // pred_region
            // Predicated region
            $region81: #{tpu_custom_call.1} parent=79 // pred_check
              _
            $region82: #{tpu_custom_call.1} parent=79 // pred_check_branch
              %364 = sbr.rel (0) target = $region84
            $region83: #{tpu_custom_call.1} parent=79 // pred_region
              // Predicated region
              $region103: #{tpu_custom_call.1} parent=83 // pred_check
                _
              $region104: #{tpu_custom_call.1} parent=83 // pred_check_branch
                %443 = sbr.rel (0) target = $region106
              $region105: #{tpu_custom_call.1} parent=83 // pred_region
                %s444 = sshrl.u32 %s353, 4
                // While loop
                $region107: #{tpu_custom_call.1} parent=105 // loop_pre_header
                  _
                $region108: #{tpu_custom_call.1} parent=105 // loop_header
                  %s446 = sphi 0, %s448
                  %p447 = scmp.ge.s32.totalorder %s446, %s444
                  %s451 = sphi 0, %s488
                  %s452 = sphi %s359, %s491
                  %s453 = sphi %s349, %s492
                $region109: #{tpu_custom_call.1} parent=105 // loop_header_branch
                  %450 = sbr.rel (%p447) target = $region113
                $region110: #{tpu_custom_call.1} parent=105 // loop_body
                  %v454 = vld [vmem:[%s452] sm:$0xff]
                  %455 = vst [vmem:[%s453] sm:$0xff] %v454
                  %v456 = vld [vmem:[%s452 + $0x10] sm:$0xff]
                  %457 = vst [vmem:[%s453 + $0x8] sm:$0xff] %v456
                  %v458 = vld [vmem:[%s452 + $0x20] sm:$0xff]
                  %459 = vst [vmem:[%s453 + $0x10] sm:$0xff] %v458
                  %v460 = vld [vmem:[%s452 + $0x30] sm:$0xff]
                  %461 = vst [vmem:[%s453 + $0x18] sm:$0xff] %v460
                  %v462 = vld [vmem:[%s452 + $0x40] sm:$0xff]
                  %463 = vst [vmem:[%s453 + $0x20] sm:$0xff] %v462
                  %v464 = vld [vmem:[%s452 + $0x50] sm:$0xff]
                  %465 = vst [vmem:[%s453 + $0x28] sm:$0xff] %v464
                  %v466 = vld [vmem:[%s452 + $0x60] sm:$0xff]
                  %467 = vst [vmem:[%s453 + $0x30] sm:$0xff] %v466
                  %v468 = vld [vmem:[%s452 + $0x70] sm:$0xff]
                  %469 = vst [vmem:[%s453 + $0x38] sm:$0xff] %v468
                  %v470 = vld [vmem:[%s452 + $0x80] sm:$0xff]
                  %471 = vst [vmem:[%s453 + $0x40] sm:$0xff] %v470
                  %v472 = vld [vmem:[%s452 + $0x90] sm:$0xff]
                  %473 = vst [vmem:[%s453 + $0x48] sm:$0xff] %v472
                  %v474 = vld [vmem:[%s452 + $0xa0] sm:$0xff]
                  %475 = vst [vmem:[%s453 + $0x50] sm:$0xff] %v474
                  %v476 = vld [vmem:[%s452 + $0xb0] sm:$0xff]
                  %477 = vst [vmem:[%s453 + $0x58] sm:$0xff] %v476
                  %v478 = vld [vmem:[%s452 + $0xc0] sm:$0xff]
                  %479 = vst [vmem:[%s453 + $0x60] sm:$0xff] %v478
                  %v480 = vld [vmem:[%s452 + $0xd0] sm:$0xff]
                  %481 = vst [vmem:[%s453 + $0x68] sm:$0xff] %v480
                  %v482 = vld [vmem:[%s452 + $0xe0] sm:$0xff]
                  %483 = vst [vmem:[%s453 + $0x70] sm:$0xff] %v482
                  %v484 = vld [vmem:[%s452 + $0xf0] sm:$0xff]
                  %485 = vst [vmem:[%s453 + $0x78] sm:$0xff] %v484
                  %s486 = sadd.s32 1, %s451
                  %p487 = scmp.ge.s32.totalorder %s486, %s444
                  %s488 = scalar_select %p487, 0, %s486
                  %s489 = smul.u32 %s488, 256
                  %s490 = smul.u32 %s488, 128
                  %s491 = scalar_lea.vmem %s359, %s489
                  %s492 = scalar_lea.vmem %s349, %s490 [#allocation5]
                $region111: #{tpu_custom_call.1} parent=105 // loop_footer
                  %s448 = sadd.s32 %s446, 1
                $region112: #{tpu_custom_call.1} parent=105 // loop_footer_branch
                  %445 = sbr.rel target = $region108
                $region113: #{tpu_custom_call.1} parent=105 // loop_exit
                  _
                %s493 = sshrl.u32 %s353, 4
                %s494 = sand.u32 %s353, 15
                %s495 = smul.u32 %s493, 16
                %s496 = smul.u32 16, %s495
                %s497 = scalar_lea.vmem %s359, %s496
                %s498 = smul.u32 8, %s495
                %s499 = scalar_lea.vmem %s349, %s498 [#allocation5]
                // While loop
                $region114: #{tpu_custom_call.1} parent=105 // loop_pre_header
                  _
                $region115: #{tpu_custom_call.1} parent=105 // loop_header
                  %s501 = sphi 0, %s503
                  %p502 = scmp.ge.s32.totalorder %s501, %s494
                  %s506 = sphi 0, %s513
                  %s507 = sphi %s497, %s516
                  %s508 = sphi %s499, %s517
                $region116: #{tpu_custom_call.1} parent=105 // loop_header_branch
                  %505 = sbr.rel (%p502) target = $region120
                $region117: #{tpu_custom_call.1} parent=105 // loop_body
                  %v509 = vld [vmem:[%s507] sm:$0xff]
                  %510 = vst [vmem:[%s508] sm:$0xff] %v509
                  %s511 = sadd.s32 1, %s506
                  %p512 = scmp.ge.s32.totalorder %s511, %s494
                  %s513 = scalar_select %p512, 0, %s511
                  %s514 = smul.u32 %s513, 16
                  %s515 = smul.u32 %s513, 8
                  %s516 = scalar_lea.vmem %s497, %s514
                  %s517 = scalar_lea.vmem %s499, %s515 [#allocation5]
                $region118: #{tpu_custom_call.1} parent=105 // loop_footer
                  %s503 = sadd.s32 %s501, 1
                $region119: #{tpu_custom_call.1} parent=105 // loop_footer_branch
                  %500 = sbr.rel target = $region115
                $region120: #{tpu_custom_call.1} parent=105 // loop_exit
                  _
              $region106: #{tpu_custom_call.1} parent=83 // pred_fallthru
                _
              // Predicated region
              $region121: #{tpu_custom_call.1} parent=83 // pred_check
                _
              $region122: #{tpu_custom_call.1} parent=83 // pred_check_branch
                %519 = sbr.rel target = $region124
              $region123: #{tpu_custom_call.1} parent=83 // pred_region
                _
              $region124: #{tpu_custom_call.1} parent=83 // pred_fallthru
                _
            $region84: #{tpu_custom_call.1} parent=79 // pred_fallthru
              _
            // Predicated region
            $region85: #{tpu_custom_call.1} parent=79 // pred_check
              _
            $region86: #{tpu_custom_call.1} parent=79 // pred_check_branch
              %366 = sbr.rel target = $region88
            $region87: #{tpu_custom_call.1} parent=79 // pred_region
              %s368 = sshrl.u32 %s353, 4
              // While loop
              $region89: #{tpu_custom_call.1} parent=87 // loop_pre_header
                _
              $region90: #{tpu_custom_call.1} parent=87 // loop_header
                %s370 = sphi 0, %s372
                %p371 = scmp.ge.s32.totalorder %s370, %s368
                %s375 = sphi 0, %s412
                %s376 = sphi %s359, %s415
                %s377 = sphi %s349, %s416
              $region91: #{tpu_custom_call.1} parent=87 // loop_header_branch
                %374 = sbr.rel (%p371) target = $region95
              $region92: #{tpu_custom_call.1} parent=87 // loop_body
                %v378 = vld [vmem:[%s376] sm:$0xff]
                %379 = vst [vmem:[%s377] sm:$0xff] %v378
                %v380 = vld [vmem:[%s376 + $0x10] sm:$0xff]
                %381 = vst [vmem:[%s377 + $0x8] sm:$0xff] %v380
                %v382 = vld [vmem:[%s376 + $0x20] sm:$0xff]
                %383 = vst [vmem:[%s377 + $0x10] sm:$0xff] %v382
                %v384 = vld [vmem:[%s376 + $0x30] sm:$0xff]
                %385 = vst [vmem:[%s377 + $0x18] sm:$0xff] %v384
                %v386 = vld [vmem:[%s376 + $0x40] sm:$0xff]
                %387 = vst [vmem:[%s377 + $0x20] sm:$0xff] %v386
                %v388 = vld [vmem:[%s376 + $0x50] sm:$0xff]
                %389 = vst [vmem:[%s377 + $0x28] sm:$0xff] %v388
                %v390 = vld [vmem:[%s376 + $0x60] sm:$0xff]
                %391 = vst [vmem:[%s377 + $0x30] sm:$0xff] %v390
                %v392 = vld [vmem:[%s376 + $0x70] sm:$0xff]
                %393 = vst [vmem:[%s377 + $0x38] sm:$0xff] %v392
                %v394 = vld [vmem:[%s376 + $0x80] sm:$0xff]
                %395 = vst [vmem:[%s377 + $0x40] sm:$0xff] %v394
                %v396 = vld [vmem:[%s376 + $0x90] sm:$0xff]
                %397 = vst [vmem:[%s377 + $0x48] sm:$0xff] %v396
                %v398 = vld [vmem:[%s376 + $0xa0] sm:$0xff]
                %399 = vst [vmem:[%s377 + $0x50] sm:$0xff] %v398
                %v400 = vld [vmem:[%s376 + $0xb0] sm:$0xff]
                %401 = vst [vmem:[%s377 + $0x58] sm:$0xff] %v400
                %v402 = vld [vmem:[%s376 + $0xc0] sm:$0xff]
                %403 = vst [vmem:[%s377 + $0x60] sm:$0xff] %v402
                %v404 = vld [vmem:[%s376 + $0xd0] sm:$0xff]
                %405 = vst [vmem:[%s377 + $0x68] sm:$0xff] %v404
                %v406 = vld [vmem:[%s376 + $0xe0] sm:$0xff]
                %407 = vst [vmem:[%s377 + $0x70] sm:$0xff] %v406
                %v408 = vld [vmem:[%s376 + $0xf0] sm:$0xff]
                %409 = vst [vmem:[%s377 + $0x78] sm:$0xff] %v408
                %s410 = sadd.s32 1, %s375
                %p411 = scmp.ge.s32.totalorder %s410, %s368
                %s412 = scalar_select %p411, 0, %s410
                %s413 = smul.u32 %s412, 256
                %s414 = smul.u32 %s412, 128
                %s415 = scalar_lea.vmem %s359, %s413
                %s416 = scalar_lea.vmem %s349, %s414 [#allocation5]
              $region93: #{tpu_custom_call.1} parent=87 // loop_footer
                %s372 = sadd.s32 %s370, 1
              $region94: #{tpu_custom_call.1} parent=87 // loop_footer_branch
                %369 = sbr.rel target = $region90
              $region95: #{tpu_custom_call.1} parent=87 // loop_exit
                _
              %s417 = sshrl.u32 %s353, 4
              %s418 = sand.u32 %s353, 15
              %s419 = smul.u32 %s417, 16
              %s420 = smul.u32 16, %s419
              %s421 = scalar_lea.vmem %s359, %s420
              %s422 = smul.u32 8, %s419
              %s423 = scalar_lea.vmem %s349, %s422 [#allocation5]
              // While loop
              $region96: #{tpu_custom_call.1} parent=87 // loop_pre_header
                _
              $region97: #{tpu_custom_call.1} parent=87 // loop_header
                %s425 = sphi 0, %s427
                %p426 = scmp.ge.s32.totalorder %s425, %s418
                %s430 = sphi 0, %s437
                %s431 = sphi %s421, %s440
                %s432 = sphi %s423, %s441
              $region98: #{tpu_custom_call.1} parent=87 // loop_header_branch
                %429 = sbr.rel (%p426) target = $region102
              $region99: #{tpu_custom_call.1} parent=87 // loop_body
                %v433 = vld [vmem:[%s431] sm:$0xff]
                %434 = vst [vmem:[%s432] sm:$0xff] %v433
                %s435 = sadd.s32 1, %s430
                %p436 = scmp.ge.s32.totalorder %s435, %s418
                %s437 = scalar_select %p436, 0, %s435
                %s438 = smul.u32 %s437, 16
                %s439 = smul.u32 %s437, 8
                %s440 = scalar_lea.vmem %s421, %s438
                %s441 = scalar_lea.vmem %s423, %s439 [#allocation5]
              $region100: #{tpu_custom_call.1} parent=87 // loop_footer
                %s427 = sadd.s32 %s425, 1
              $region101: #{tpu_custom_call.1} parent=87 // loop_footer_branch
                %424 = sbr.rel target = $region97
              $region102: #{tpu_custom_call.1} parent=87 // loop_exit
                _
            $region88: #{tpu_custom_call.1} parent=79 // pred_fallthru
              _
          $region80: #{tpu_custom_call.1} parent=75 // pred_fallthru
            _
          %520 = vnop
        $region76: #{tpu_custom_call.1} parent=15 // pred_fallthru
          _
      $region16: #{tpu_custom_call.1} parent=5 // pred_fallthru
        _
      %p521 = scmp.le.s32.totalorder 1, %s9
      %p522 = scmp.lt.s32.totalorder %s9, 5
      %p523 = pnand %p521, %p522
      %p524 = pneg %p523
      // Predicated region
      $region125: #{tpu_custom_call.1} parent=5 // pred_check
        _
      $region126: #{tpu_custom_call.1} parent=5 // pred_check_branch
        %526 = sbr.rel (%p523) target = $region128
      $region127: #{tpu_custom_call.1} parent=5 // pred_region
        %s527 = ssub.s32 %s9, 1
        %s528 = sand.u32 %s62, 1
        %s529 = sand.u32 %s62, 1
        %s530 = smul.addr %s529, 128
        %s531 = scalar_lea.vmem [#allocation4], %s530
        // Predicated region
        $region129: #{tpu_custom_call.1} parent=127 // pred_check
          %p532 = pneg %p75
        $region130: #{tpu_custom_call.1} parent=127 // pred_check_branch
          %534 = sbr.rel (%p532) target = $region132
        $region131: #{tpu_custom_call.1} parent=127 // pred_region
          _
        $region132: #{tpu_custom_call.1} parent=127 // pred_fallthru
          _
        %s535 = sand.u32 %s90, 1
        %s536 = sand.u32 %s90, 1
        %s537 = smul.addr %s536, 128
        %s538 = scalar_lea.vmem [#allocation5], %s537
        // Predicated region
        $region133: #{tpu_custom_call.1} parent=127 // pred_check
          %p539 = pneg %p103
        $region134: #{tpu_custom_call.1} parent=127 // pred_check_branch
          %541 = sbr.rel (%p539) target = $region136
        $region135: #{tpu_custom_call.1} parent=127 // pred_region
          _
        $region136: #{tpu_custom_call.1} parent=127 // pred_fallthru
          _
        %s542 = smul.u32 2, %s18
        %s543 = ssub.s32 3, %s542
        %p544 = scmp.lt.s32.totalorder %s543, 2
        %s545 = scalar_select %p544, %s543, 2
        %s546 = smul.u32 128, %s545
        %p547 = scmp.lt.s32.totalorder %s542, 2
        %s548 = scalar_select %p547, %s542, 2
        %s549 = smul.addr %s548, 8
        %s550 = scalar_lea.vmem %s0, %s549
        %p551 = pneg %p47
        %p552 = pneg %p44
        %s553 = sand.u32 %s62, 1
        %s554 = sand.u32 %s62, 1
        %s555 = smul.addr %s554, 128
        %s556 = scalar_lea.vmem [#allocation4], %s555
        %p557 = pneg %p75
        %p558 = pneg %p72
        %s559 = sand.u32 %s90, 1
        %s560 = sand.u32 %s90, 1
        %s561 = smul.addr %s560, 128
        %s562 = scalar_lea.vmem [#allocation5], %s561
        %p563 = pneg %p103
        %p564 = pneg %p100
        %p565 = pneg %p129
        %p566 = pneg %p126
        %s567 = sand.u32 %s116, 1
        %s568 = sand.u32 %s116, 1
        %s569 = smul.addr %s568, 16
        %s570 = scalar_lea.vmem [#allocation6], %s569
        %s571 = smul.u32 2, %s18
        %s572 = ssub.s32 3, %s571
        %p573 = scmp.lt.s32.totalorder %s572, 2
        %s574 = scalar_select %p573, %s572, 2
        %s575 = smul.u32 128, %s574
        %p576 = scmp.lt.s32.totalorder %s571, 2
        %s577 = scalar_select %p576, %s571, 2
        %s578 = smul.addr %s577, 8
        %s579 = scalar_lea.vmem %s0, %s578
        %s580 = smul.u32 2, %s18
        %s581 = ssub.s32 3, %s580
        %p582 = scmp.lt.s32.totalorder %s581, 2
        %s583 = scalar_select %p582, %s581, 2
        %s584 = smul.u32 128, %s583
        %s585 = smul.u32 16, %s18
        %s586 = ssub.s32 20, %s585
        %p587 = scmp.lt.s32.totalorder %s586, 16
        %s588 = scalar_select %p587, %s586, 16
        %s589 = smul.u32 128, %s588
        %s590 = smul.u32 16, %s18
        %s591 = ssub.s32 20, %s590
        %p592 = scmp.lt.s32.totalorder %s591, 16
        %s593 = scalar_select %p592, %s591, 16
        %s594 = smul.u32 128, %s593
        %s595 = smul.u32 2, %s18
        %s596 = ssub.s32 3, %s595
        %p597 = scmp.lt.s32.totalorder %s596, 2
        %s598 = scalar_select %p597, %s596, 2
        %s599 = smul.u32 128, %s598
        %v600 = vld [vmem:[%s531] sm:$0xff]
        %v601 = vld [vmem:[%s531 + $0x8] sm:$0xff]
        %v602 = vld [vmem:[%s531 + $0x10] sm:$0xff]
        %v603 = vld [vmem:[%s531 + $0x18] sm:$0xff]
        %v604 = vld [vmem:[%s531 + $0x20] sm:$0xff]
        %v605 = vld [vmem:[%s531 + $0x28] sm:$0xff]
        %v606 = vld [vmem:[%s531 + $0x30] sm:$0xff]
        %v607 = vld [vmem:[%s531 + $0x38] sm:$0xff]
        %v608 = vld [vmem:[%s531 + $0x40] sm:$0xff]
        %v609 = vld [vmem:[%s531 + $0x48] sm:$0xff]
        %v610 = vld [vmem:[%s531 + $0x50] sm:$0xff]
        %v611 = vld [vmem:[%s531 + $0x58] sm:$0xff]
        %v612 = vld [vmem:[%s531 + $0x60] sm:$0xff]
        %v613 = vld [vmem:[%s531 + $0x68] sm:$0xff]
        %v614 = vld [vmem:[%s531 + $0x70] sm:$0xff]
        %v615 = vld [vmem:[%s531 + $0x78] sm:$0xff]
        %v616 = vld [vmem:[%s538] sm:$0xff]
        %v617 = vld [vmem:[%s538 + $0x8] sm:$0xff]
        %v618 = vld [vmem:[%s538 + $0x10] sm:$0xff]
        %v619 = vld [vmem:[%s538 + $0x18] sm:$0xff]
        %v620 = vld [vmem:[%s538 + $0x20] sm:$0xff]
        %v621 = vld [vmem:[%s538 + $0x28] sm:$0xff]
        %v622 = vld [vmem:[%s538 + $0x30] sm:$0xff]
        %v623 = vld [vmem:[%s538 + $0x38] sm:$0xff]
        %v624 = vld [vmem:[%s538 + $0x40] sm:$0xff]
        %v625 = vld [vmem:[%s538 + $0x48] sm:$0xff]
        %v626 = vld [vmem:[%s538 + $0x50] sm:$0xff]
        %v627 = vld [vmem:[%s538 + $0x58] sm:$0xff]
        %v628 = vld [vmem:[%s538 + $0x60] sm:$0xff]
        %v629 = vld [vmem:[%s538 + $0x68] sm:$0xff]
        %v630 = vld [vmem:[%s538 + $0x70] sm:$0xff]
        %v631 = vld [vmem:[%s538 + $0x78] sm:$0xff]
        %v632 = vlaneseq
        %v633 = vshrl.u32 %v632, 7
        %s634 = smul.u32 %s19, 8
        %v635 = vstv %s634
        %v636 = vadd.s32 %v633, %v635
        %v637 = vlaneseq
        %v638 = vand.u32 %v637, 127
        %vm639 = vcmp.lt.s32.totalorder %v636, 10
        %v640 = vld [vmem:[%s579] sm:$0xff]
        %v641 = vld [vmem:[%s579 + $0x8] sm:$0xff]
        %v642 = vcombine.high %v640, %v640
        %v644 = vunpack.c.l.s4 1966171168
        %v645 = vunpack.c.0.s8 %v644
        %v646 = vlaneseq
        %v647 = vshrl.u32 %v646, 7
        %v648 = vsub.s32 %v645, %v647
        %v649 = vrot.slane %v640, %v648
        %v651 = vunpack.c.l.s4 1966171168
        %v652 = vunpack.c.0.s8 %v651
        %v653 = vlaneseq
        %v654 = vshrl.u32 %v653, 7
        %v655 = vsub.s32 %v652, %v654
        %v656 = vrot.slane %v642, %v655
        %v657 = vcombine.high %v649, %v649
        %v658 = vcombine.high %v656, %v656
        %v660 = vunpack.c.l.s4 1966171168
        %v661 = vunpack.c.0.s8 %v660
        %v662 = vlaneseq
        %v663 = vshrl.u32 %v662, 7
        %v664 = vsub.s32 %v661, %v663
        %v665 = vrot.slane %v649, %v664
        %v667 = vunpack.c.l.s4 1966171168
        %v668 = vunpack.c.0.s8 %v667
        %v669 = vlaneseq
        %v670 = vshrl.u32 %v669, 7
        %v671 = vsub.s32 %v668, %v670
        %v672 = vrot.slane %v656, %v671
        %v674 = vunpack.c.l.s4 1966171168
        %v675 = vunpack.c.0.s8 %v674
        %v676 = vlaneseq
        %v677 = vshrl.u32 %v676, 7
        %v678 = vsub.s32 %v675, %v677
        %v679 = vrot.slane %v657, %v678
        %v681 = vunpack.c.l.s4 1966171168
        %v682 = vunpack.c.0.s8 %v681
        %v683 = vlaneseq
        %v684 = vshrl.u32 %v683, 7
        %v685 = vsub.s32 %v682, %v684
        %v686 = vrot.slane %v658, %v685
        %v687 = vcombine.high %v665, %v665
        %v688 = vcombine.high %v672, %v672
        %v689 = vcombine.high %v679, %v679
        %v690 = vcombine.high %v686, %v686
        %v691 = vcombine.high %v641, %v641
        %v693 = vunpack.c.l.s4 1966171168
        %v694 = vunpack.c.0.s8 %v693
        %v695 = vlaneseq
        %v696 = vshrl.u32 %v695, 7
        %v697 = vsub.s32 %v694, %v696
        %v698 = vrot.slane %v641, %v697
        %v700 = vunpack.c.l.s4 1966171168
        %v701 = vunpack.c.0.s8 %v700
        %v702 = vlaneseq
        %v703 = vshrl.u32 %v702, 7
        %v704 = vsub.s32 %v701, %v703
        %v705 = vrot.slane %v691, %v704
        %v706 = vcombine.high %v698, %v698
        %v707 = vcombine.high %v705, %v705
        %v709 = vunpack.c.l.s4 1966171168
        %v710 = vunpack.c.0.s8 %v709
        %v711 = vlaneseq
        %v712 = vshrl.u32 %v711, 7
        %v713 = vsub.s32 %v710, %v712
        %v714 = vrot.slane %v698, %v713
        %v716 = vunpack.c.l.s4 1966171168
        %v717 = vunpack.c.0.s8 %v716
        %v718 = vlaneseq
        %v719 = vshrl.u32 %v718, 7
        %v720 = vsub.s32 %v717, %v719
        %v721 = vrot.slane %v705, %v720
        %v723 = vunpack.c.l.s4 1966171168
        %v724 = vunpack.c.0.s8 %v723
        %v725 = vlaneseq
        %v726 = vshrl.u32 %v725, 7
        %v727 = vsub.s32 %v724, %v726
        %v728 = vrot.slane %v706, %v727
        %v730 = vunpack.c.l.s4 1966171168
        %v731 = vunpack.c.0.s8 %v730
        %v732 = vlaneseq
        %v733 = vshrl.u32 %v732, 7
        %v734 = vsub.s32 %v731, %v733
        %v735 = vrot.slane %v707, %v734
        %v736 = vcombine.high %v714, %v714
        %v737 = vcombine.high %v721, %v721
        %v738 = vcombine.high %v728, %v728
        %v739 = vcombine.high %v735, %v735
        %v740 = vmul.u32 %v636, 4
        %v741 = vlaneseq
        %v742 = vshrl.u32 %v741, 7
        %v743 = vsub.s32 0, %v742
        %v744 = vrot.slane %v665, %v743
        %v745 = vlaneseq
        %v746 = vshrl.u32 %v745, 7
        %v747 = vsub.s32 0, %v746
        %v748 = vrot.slane %v679, %v747
        %v749 = vlaneseq
        %v750 = vshrl.u32 %v749, 7
        %v751 = vsub.s32 0, %v750
        %v752 = vrot.slane %v687, %v751
        %v753 = vlaneseq
        %v754 = vshrl.u32 %v753, 7
        %v755 = vsub.s32 0, %v754
        %v756 = vrot.slane %v689, %v755
        %v757 = vlaneseq
        %v758 = vshrl.u32 %v757, 7
        %v759 = vsub.s32 0, %v758
        %v760 = vrot.slane %v672, %v759
        %v761 = vlaneseq
        %v762 = vshrl.u32 %v761, 7
        %v763 = vsub.s32 0, %v762
        %v764 = vrot.slane %v686, %v763
        %v765 = vlaneseq
        %v766 = vshrl.u32 %v765, 7
        %v767 = vsub.s32 0, %v766
        %v768 = vrot.slane %v688, %v767
        %v769 = vlaneseq
        %v770 = vshrl.u32 %v769, 7
        %v771 = vsub.s32 0, %v770
        %v772 = vrot.slane %v690, %v771
        %v773 = vlaneseq
        %v774 = vshrl.u32 %v773, 7
        %v775 = vsub.s32 0, %v774
        %v776 = vrot.slane %v714, %v775
        %v777 = vlaneseq
        %v778 = vshrl.u32 %v777, 7
        %v779 = vsub.s32 0, %v778
        %v780 = vrot.slane %v728, %v779
        %v781 = vlaneseq
        %v782 = vshrl.u32 %v781, 7
        %v783 = vsub.s32 0, %v782
        %v784 = vrot.slane %v736, %v783
        %v785 = vlaneseq
        %v786 = vshrl.u32 %v785, 7
        %v787 = vsub.s32 0, %v786
        %v788 = vrot.slane %v738, %v787
        %v789 = vlaneseq
        %v790 = vshrl.u32 %v789, 7
        %v791 = vsub.s32 0, %v790
        %v792 = vrot.slane %v721, %v791
        %v793 = vlaneseq
        %v794 = vshrl.u32 %v793, 7
        %v795 = vsub.s32 0, %v794
        %v796 = vrot.slane %v735, %v795
        %v797 = vlaneseq
        %v798 = vshrl.u32 %v797, 7
        %v799 = vsub.s32 0, %v798
        %v800 = vrot.slane %v737, %v799
        %v801 = vlaneseq
        %v802 = vshrl.u32 %v801, 7
        %v803 = vsub.s32 0, %v802
        %v804 = vrot.slane %v739, %v803
        %805 = vset.pattern.permute.xlu0 0
        %806 = vperm.xlu0 %805, %v744
        %v807 = vpop.permute.xlu0 %806
        %808 = vset.pattern.permute.xlu0 0
        %809 = vperm.xlu0 %808, %v748
        %v810 = vpop.permute.xlu0 %809
        %811 = vset.pattern.permute.xlu0 0
        %812 = vperm.xlu0 %811, %v752
        %v813 = vpop.permute.xlu0 %812
        %814 = vset.pattern.permute.xlu0 0
        %815 = vperm.xlu0 %814, %v756
        %v816 = vpop.permute.xlu0 %815
        %817 = vset.pattern.permute.xlu0 0
        %818 = vperm.xlu0 %817, %v760
        %v819 = vpop.permute.xlu0 %818
        %820 = vset.pattern.permute.xlu0 0
        %821 = vperm.xlu0 %820, %v764
        %v822 = vpop.permute.xlu0 %821
        %823 = vset.pattern.permute.xlu0 0
        %824 = vperm.xlu0 %823, %v768
        %v825 = vpop.permute.xlu0 %824
        %826 = vset.pattern.permute.xlu0 0
        %827 = vperm.xlu0 %826, %v772
        %v828 = vpop.permute.xlu0 %827
        %829 = vset.pattern.permute.xlu0 0
        %830 = vperm.xlu0 %829, %v776
        %v831 = vpop.permute.xlu0 %830
        %832 = vset.pattern.permute.xlu0 0
        %833 = vperm.xlu0 %832, %v780
        %v834 = vpop.permute.xlu0 %833
        %835 = vset.pattern.permute.xlu0 0
        %836 = vperm.xlu0 %835, %v784
        %v837 = vpop.permute.xlu0 %836
        %838 = vset.pattern.permute.xlu0 0
        %839 = vperm.xlu0 %838, %v788
        %v840 = vpop.permute.xlu0 %839
        %841 = vset.pattern.permute.xlu0 0
        %842 = vperm.xlu0 %841, %v792
        %v843 = vpop.permute.xlu0 %842
        %844 = vset.pattern.permute.xlu0 0
        %845 = vperm.xlu0 %844, %v796
        %v846 = vpop.permute.xlu0 %845
        %847 = vset.pattern.permute.xlu0 0
        %848 = vperm.xlu0 %847, %v800
        %v849 = vpop.permute.xlu0 %848
        %850 = vset.pattern.permute.xlu0 0
        %851 = vperm.xlu0 %850, %v804
        %v852 = vpop.permute.xlu0 %851
        %v853 = vsub.s32 %v807, %v740
        %v854 = vsub.s32 %v810, %v740
        %v855 = vsub.s32 %v813, %v740
        %v856 = vsub.s32 %v816, %v740
        %v857 = vsub.s32 %v819, %v740
        %v858 = vsub.s32 %v822, %v740
        %v859 = vsub.s32 %v825, %v740
        %v860 = vsub.s32 %v828, %v740
        %v861 = vsub.s32 %v831, %v740
        %v862 = vsub.s32 %v834, %v740
        %v863 = vsub.s32 %v837, %v740
        %v864 = vsub.s32 %v840, %v740
        %v865 = vsub.s32 %v843, %v740
        %v866 = vsub.s32 %v846, %v740
        %v867 = vsub.s32 %v849, %v740
        %v868 = vsub.s32 %v852, %v740
        %v869 = vmul.u32 %v853, 32
        %v870 = vmul.u32 %v854, 32
        %v871 = vmul.u32 %v855, 32
        %v872 = vmul.u32 %v856, 32
        %v873 = vmul.u32 %v857, 32
        %v874 = vmul.u32 %v858, 32
        %v875 = vmul.u32 %v859, 32
        %v876 = vmul.u32 %v860, 32
        %v877 = vmul.u32 %v861, 32
        %v878 = vmul.u32 %v862, 32
        %v879 = vmul.u32 %v863, 32
        %v880 = vmul.u32 %v864, 32
        %v881 = vmul.u32 %v865, 32
        %v882 = vmul.u32 %v866, 32
        %v883 = vmul.u32 %v867, 32
        %v884 = vmul.u32 %v868, 32
        %vm885 = vcmp.lt.s32.totalorder %v638, %v869
        %vm886 = vcmp.lt.s32.totalorder %v638, %v870
        %vm887 = vcmp.lt.s32.totalorder %v638, %v871
        %vm888 = vcmp.lt.s32.totalorder %v638, %v872
        %vm889 = vcmp.lt.s32.totalorder %v638, %v873
        %vm890 = vcmp.lt.s32.totalorder %v638, %v874
        %vm891 = vcmp.lt.s32.totalorder %v638, %v875
        %vm892 = vcmp.lt.s32.totalorder %v638, %v876
        %vm893 = vcmp.lt.s32.totalorder %v638, %v877
        %vm894 = vcmp.lt.s32.totalorder %v638, %v878
        %vm895 = vcmp.lt.s32.totalorder %v638, %v879
        %vm896 = vcmp.lt.s32.totalorder %v638, %v880
        %vm897 = vcmp.lt.s32.totalorder %v638, %v881
        %vm898 = vcmp.lt.s32.totalorder %v638, %v882
        %vm899 = vcmp.lt.s32.totalorder %v638, %v883
        %vm900 = vcmp.lt.s32.totalorder %v638, %v884
        %v901 = vsel %vm639, 1, 0
        %vm902 = vcmp.eq.s32.totalorder %v901, 1
        %vm903 = vmand %vm902, %vm885
        %vm904 = vmand %vm902, %vm886
        %vm905 = vmand %vm902, %vm887
        %vm906 = vmand %vm902, %vm888
        %vm907 = vmand %vm902, %vm889
        %vm908 = vmand %vm902, %vm890
        %vm909 = vmand %vm902, %vm891
        %vm910 = vmand %vm902, %vm892
        %vm911 = vmand %vm902, %vm893
        %vm912 = vmand %vm902, %vm894
        %vm913 = vmand %vm902, %vm895
        %vm914 = vmand %vm902, %vm896
        %vm915 = vmand %vm902, %vm897
        %vm916 = vmand %vm902, %vm898
        %vm917 = vmand %vm902, %vm899
        %vm918 = vmand %vm902, %vm900
        %v919 = vsel %vm902, %v600, 0.0
        %v920 = vsel %vm902, %v601, 0.0
        %v921 = vsel %vm902, %v602, 0.0
        %v922 = vsel %vm902, %v603, 0.0
        %v923 = vsel %vm902, %v604, 0.0
        %v924 = vsel %vm902, %v605, 0.0
        %v925 = vsel %vm902, %v606, 0.0
        %v926 = vsel %vm902, %v607, 0.0
        %v927 = vsel %vm902, %v608, 0.0
        %v928 = vsel %vm902, %v609, 0.0
        %v929 = vsel %vm902, %v610, 0.0
        %v930 = vsel %vm902, %v611, 0.0
        %v931 = vsel %vm902, %v612, 0.0
        %v932 = vsel %vm902, %v613, 0.0
        %v933 = vsel %vm902, %v614, 0.0
        %v934 = vsel %vm902, %v615, 0.0
        %v935 = vsel %vm903, %v616, 0.0
        %v936 = vsel %vm904, %v617, 0.0
        %v937 = vsel %vm905, %v618, 0.0
        %v938 = vsel %vm906, %v619, 0.0
        %v939 = vsel %vm907, %v620, 0.0
        %v940 = vsel %vm908, %v621, 0.0
        %v941 = vsel %vm909, %v622, 0.0
        %v942 = vsel %vm910, %v623, 0.0
        %v943 = vsel %vm911, %v624, 0.0
        %v944 = vsel %vm912, %v625, 0.0
        %v945 = vsel %vm913, %v626, 0.0
        %v946 = vsel %vm914, %v627, 0.0
        %v947 = vsel %vm915, %v628, 0.0
        %v948 = vsel %vm916, %v629, 0.0
        %v949 = vsel %vm917, %v630, 0.0
        %v950 = vsel %vm918, %v631, 0.0
        %v951 = vrot.slane %v919, 4
        %v952 = vadd.f32 %v919, %v951
        %v953 = vrot.slane %v952, 2
        %v954 = vadd.f32 %v952, %v953
        %v955 = vrot.slane %v954, 1
        %v956 = vadd.f32 %v954, %v955
        %v957 = vrot.slane %v920, 4
        %v958 = vadd.f32 %v920, %v957
        %v959 = vrot.slane %v958, 2
        %v960 = vadd.f32 %v958, %v959
        %v961 = vrot.slane %v960, 1
        %v962 = vadd.f32 %v960, %v961
        %v963 = vrot.slane %v921, 4
        %v964 = vadd.f32 %v921, %v963
        %v965 = vrot.slane %v964, 2
        %v966 = vadd.f32 %v964, %v965
        %v967 = vrot.slane %v966, 1
        %v968 = vadd.f32 %v966, %v967
        %v969 = vrot.slane %v922, 4
        %v970 = vadd.f32 %v922, %v969
        %v971 = vrot.slane %v970, 2
        %v972 = vadd.f32 %v970, %v971
        %v973 = vrot.slane %v972, 1
        %v974 = vadd.f32 %v972, %v973
        %v975 = vrot.slane %v923, 4
        %v976 = vadd.f32 %v923, %v975
        %v977 = vrot.slane %v976, 2
        %v978 = vadd.f32 %v976, %v977
        %v979 = vrot.slane %v978, 1
        %v980 = vadd.f32 %v978, %v979
        %v981 = vrot.slane %v924, 4
        %v982 = vadd.f32 %v924, %v981
        %v983 = vrot.slane %v982, 2
        %v984 = vadd.f32 %v982, %v983
        %v985 = vrot.slane %v984, 1
        %v986 = vadd.f32 %v984, %v985
        %v987 = vrot.slane %v925, 4
        %v988 = vadd.f32 %v925, %v987
        %v989 = vrot.slane %v988, 2
        %v990 = vadd.f32 %v988, %v989
        %v991 = vrot.slane %v990, 1
        %v992 = vadd.f32 %v990, %v991
        %v993 = vrot.slane %v926, 4
        %v994 = vadd.f32 %v926, %v993
        %v995 = vrot.slane %v994, 2
        %v996 = vadd.f32 %v994, %v995
        %v997 = vrot.slane %v996, 1
        %v998 = vadd.f32 %v996, %v997
        %v999 = vrot.slane %v927, 4
        %v1000 = vadd.f32 %v927, %v999
        %v1001 = vrot.slane %v1000, 2
        %v1002 = vadd.f32 %v1000, %v1001
        %v1003 = vrot.slane %v1002, 1
        %v1004 = vadd.f32 %v1002, %v1003
        %v1005 = vrot.slane %v928, 4
        %v1006 = vadd.f32 %v928, %v1005
        %v1007 = vrot.slane %v1006, 2
        %v1008 = vadd.f32 %v1006, %v1007
        %v1009 = vrot.slane %v1008, 1
        %v1010 = vadd.f32 %v1008, %v1009
        %v1011 = vrot.slane %v929, 4
        %v1012 = vadd.f32 %v929, %v1011
        %v1013 = vrot.slane %v1012, 2
        %v1014 = vadd.f32 %v1012, %v1013
        %v1015 = vrot.slane %v1014, 1
        %v1016 = vadd.f32 %v1014, %v1015
        %v1017 = vrot.slane %v930, 4
        %v1018 = vadd.f32 %v930, %v1017
        %v1019 = vrot.slane %v1018, 2
        %v1020 = vadd.f32 %v1018, %v1019
        %v1021 = vrot.slane %v1020, 1
        %v1022 = vadd.f32 %v1020, %v1021
        %v1023 = vrot.slane %v931, 4
        %v1024 = vadd.f32 %v931, %v1023
        %v1025 = vrot.slane %v1024, 2
        %v1026 = vadd.f32 %v1024, %v1025
        %v1027 = vrot.slane %v1026, 1
        %v1028 = vadd.f32 %v1026, %v1027
        %v1029 = vrot.slane %v932, 4
        %v1030 = vadd.f32 %v932, %v1029
        %v1031 = vrot.slane %v1030, 2
        %v1032 = vadd.f32 %v1030, %v1031
        %v1033 = vrot.slane %v1032, 1
        %v1034 = vadd.f32 %v1032, %v1033
        %v1035 = vrot.slane %v933, 4
        %v1036 = vadd.f32 %v933, %v1035
        %v1037 = vrot.slane %v1036, 2
        %v1038 = vadd.f32 %v1036, %v1037
        %v1039 = vrot.slane %v1038, 1
        %v1040 = vadd.f32 %v1038, %v1039
        %v1041 = vrot.slane %v934, 4
        %v1042 = vadd.f32 %v934, %v1041
        %v1043 = vrot.slane %v1042, 2
        %v1044 = vadd.f32 %v1042, %v1043
        %v1045 = vrot.slane %v1044, 1
        %v1046 = vadd.f32 %v1044, %v1045
        %v1047 = vrot.slane %v935, 4
        %v1048 = vadd.f32 %v935, %v1047
        %v1049 = vrot.slane %v1048, 2
        %v1050 = vadd.f32 %v1048, %v1049
        %v1051 = vrot.slane %v1050, 1
        %v1052 = vadd.f32 %v1050, %v1051
        %v1053 = vrot.slane %v936, 4
        %v1054 = vadd.f32 %v936, %v1053
        %v1055 = vrot.slane %v1054, 2
        %v1056 = vadd.f32 %v1054, %v1055
        %v1057 = vrot.slane %v1056, 1
        %v1058 = vadd.f32 %v1056, %v1057
        %v1059 = vrot.slane %v937, 4
        %v1060 = vadd.f32 %v937, %v1059
        %v1061 = vrot.slane %v1060, 2
        %v1062 = vadd.f32 %v1060, %v1061
        %v1063 = vrot.slane %v1062, 1
        %v1064 = vadd.f32 %v1062, %v1063
        %v1065 = vrot.slane %v938, 4
        %v1066 = vadd.f32 %v938, %v1065
        %v1067 = vrot.slane %v1066, 2
        %v1068 = vadd.f32 %v1066, %v1067
        %v1069 = vrot.slane %v1068, 1
        %v1070 = vadd.f32 %v1068, %v1069
        %v1071 = vrot.slane %v939, 4
        %v1072 = vadd.f32 %v939, %v1071
        %v1073 = vrot.slane %v1072, 2
        %v1074 = vadd.f32 %v1072, %v1073
        %v1075 = vrot.slane %v1074, 1
        %v1076 = vadd.f32 %v1074, %v1075
        %v1077 = vrot.slane %v940, 4
        %v1078 = vadd.f32 %v940, %v1077
        %v1079 = vrot.slane %v1078, 2
        %v1080 = vadd.f32 %v1078, %v1079
        %v1081 = vrot.slane %v1080, 1
        %v1082 = vadd.f32 %v1080, %v1081
        %v1083 = vrot.slane %v941, 4
        %v1084 = vadd.f32 %v941, %v1083
        %v1085 = vrot.slane %v1084, 2
        %v1086 = vadd.f32 %v1084, %v1085
        %v1087 = vrot.slane %v1086, 1
        %v1088 = vadd.f32 %v1086, %v1087
        %v1089 = vrot.slane %v942, 4
        %v1090 = vadd.f32 %v942, %v1089
        %v1091 = vrot.slane %v1090, 2
        %v1092 = vadd.f32 %v1090, %v1091
        %v1093 = vrot.slane %v1092, 1
        %v1094 = vadd.f32 %v1092, %v1093
        %v1095 = vrot.slane %v943, 4
        %v1096 = vadd.f32 %v943, %v1095
        %v1097 = vrot.slane %v1096, 2
        %v1098 = vadd.f32 %v1096, %v1097
        %v1099 = vrot.slane %v1098, 1
        %v1100 = vadd.f32 %v1098, %v1099
        %v1101 = vrot.slane %v944, 4
        %v1102 = vadd.f32 %v944, %v1101
        %v1103 = vrot.slane %v1102, 2
        %v1104 = vadd.f32 %v1102, %v1103
        %v1105 = vrot.slane %v1104, 1
        %v1106 = vadd.f32 %v1104, %v1105
        %v1107 = vrot.slane %v945, 4
        %v1108 = vadd.f32 %v945, %v1107
        %v1109 = vrot.slane %v1108, 2
        %v1110 = vadd.f32 %v1108, %v1109
        %v1111 = vrot.slane %v1110, 1
        %v1112 = vadd.f32 %v1110, %v1111
        %v1113 = vrot.slane %v946, 4
        %v1114 = vadd.f32 %v946, %v1113
        %v1115 = vrot.slane %v1114, 2
        %v1116 = vadd.f32 %v1114, %v1115
        %v1117 = vrot.slane %v1116, 1
        %v1118 = vadd.f32 %v1116, %v1117
        %v1119 = vrot.slane %v947, 4
        %v1120 = vadd.f32 %v947, %v1119
        %v1121 = vrot.slane %v1120, 2
        %v1122 = vadd.f32 %v1120, %v1121
        %v1123 = vrot.slane %v1122, 1
        %v1124 = vadd.f32 %v1122, %v1123
        %v1125 = vrot.slane %v948, 4
        %v1126 = vadd.f32 %v948, %v1125
        %v1127 = vrot.slane %v1126, 2
        %v1128 = vadd.f32 %v1126, %v1127
        %v1129 = vrot.slane %v1128, 1
        %v1130 = vadd.f32 %v1128, %v1129
        %v1131 = vrot.slane %v949, 4
        %v1132 = vadd.f32 %v949, %v1131
        %v1133 = vrot.slane %v1132, 2
        %v1134 = vadd.f32 %v1132, %v1133
        %v1135 = vrot.slane %v1134, 1
        %v1136 = vadd.f32 %v1134, %v1135
        %v1137 = vrot.slane %v950, 4
        %v1138 = vadd.f32 %v950, %v1137
        %v1139 = vrot.slane %v1138, 2
        %v1140 = vadd.f32 %v1138, %v1139
        %v1141 = vrot.slane %v1140, 1
        %v1142 = vadd.f32 %v1140, %v1141
        %p1143 = scmp.eq.s32.totalorder %s19, 0
        // Predicated region
        $region137: #{tpu_custom_call.1} parent=127 // pred_check
          %p1144 = pneg %p1143
        $region138: #{tpu_custom_call.1} parent=127 // pred_check_branch
          %1146 = sbr.rel (%p1144) target = $region140
        $region139: #{tpu_custom_call.1} parent=127 // pred_region
          %vm1163 = vcmask 1041409
          %v1164 = vsel %vm1163, %v962, %v956
          %vm1165 = vcmask 1042434
          %v1166 = vsel %vm1165, %v968, %v1164
          %vm1167 = vcmask 1043459
          %v1168 = vsel %vm1167, %v974, %v1166
          %vm1169 = vcmask 1044484
          %v1170 = vsel %vm1169, %v980, %v1168
          %vm1171 = vcmask 1045509
          %v1172 = vsel %vm1171, %v986, %v1170
          %vm1173 = vcmask 1046534
          %v1174 = vsel %vm1173, %v992, %v1172
          %vm1175 = vcmask 1047559
          %v1176 = vsel %vm1175, %v998, %v1174
          %v1177 = vsel %vm1163, %v1010, %v1004
          %v1178 = vsel %vm1165, %v1016, %v1177
          %v1179 = vsel %vm1167, %v1022, %v1178
          %v1180 = vsel %vm1169, %v1028, %v1179
          %v1181 = vsel %vm1171, %v1034, %v1180
          %v1182 = vsel %vm1173, %v1040, %v1181
          %v1183 = vsel %vm1175, %v1046, %v1182
          %1186 = vst [vmem:[#allocation2] sm:$0xff] %v1176
          %1187 = vst [vmem:[#allocation2 + $0x8] sm:$0xff] %v1183
          %v1204 = vsel %vm1163, %v1058, %v1052
          %v1205 = vsel %vm1165, %v1064, %v1204
          %v1206 = vsel %vm1167, %v1070, %v1205
          %v1207 = vsel %vm1169, %v1076, %v1206
          %v1208 = vsel %vm1171, %v1082, %v1207
          %v1209 = vsel %vm1173, %v1088, %v1208
          %v1210 = vsel %vm1175, %v1094, %v1209
          %v1211 = vsel %vm1163, %v1106, %v1100
          %v1212 = vsel %vm1165, %v1112, %v1211
          %v1213 = vsel %vm1167, %v1118, %v1212
          %v1214 = vsel %vm1169, %v1124, %v1213
          %v1215 = vsel %vm1171, %v1130, %v1214
          %v1216 = vsel %vm1173, %v1136, %v1215
          %v1217 = vsel %vm1175, %v1142, %v1216
          %1220 = vst [vmem:[#allocation3] sm:$0xff] %v1210
          %1221 = vst [vmem:[#allocation3 + $0x8] sm:$0xff] %v1217
        $region140: #{tpu_custom_call.1} parent=127 // pred_fallthru
          _
        %p1222 = scmp.gt.s32.totalorder %s19, 0
        // Predicated region
        $region141: #{tpu_custom_call.1} parent=127 // pred_check
          %p1223 = pneg %p1222
        $region142: #{tpu_custom_call.1} parent=127 // pred_check_branch
          %1225 = sbr.rel (%p1223) target = $region144
        $region143: #{tpu_custom_call.1} parent=127 // pred_region
          %v1226 = vld [vmem:[#allocation2] sm:$0xff]
          %v1227 = vld [vmem:[#allocation2 + $0x8] sm:$0xff]
          %vm1244 = vcmask 1041409
          %v1245 = vsel %vm1244, %v962, %v956
          %vm1246 = vcmask 1042434
          %v1247 = vsel %vm1246, %v968, %v1245
          %vm1248 = vcmask 1043459
          %v1249 = vsel %vm1248, %v974, %v1247
          %vm1250 = vcmask 1044484
          %v1251 = vsel %vm1250, %v980, %v1249
          %vm1252 = vcmask 1045509
          %v1253 = vsel %vm1252, %v986, %v1251
          %vm1254 = vcmask 1046534
          %v1255 = vsel %vm1254, %v992, %v1253
          %vm1256 = vcmask 1047559
          %v1257 = vsel %vm1256, %v998, %v1255
          %v1258 = vsel %vm1244, %v1010, %v1004
          %v1259 = vsel %vm1246, %v1016, %v1258
          %v1260 = vsel %vm1248, %v1022, %v1259
          %v1261 = vsel %vm1250, %v1028, %v1260
          %v1262 = vsel %vm1252, %v1034, %v1261
          %v1263 = vsel %vm1254, %v1040, %v1262
          %v1264 = vsel %vm1256, %v1046, %v1263
          %v1267 = vadd.f32 %v1226, %v1257
          %v1268 = vadd.f32 %v1227, %v1264
          %1269 = vst [vmem:[#allocation2] sm:$0xff] %v1267
          %1270 = vst [vmem:[#allocation2 + $0x8] sm:$0xff] %v1268
          %v1271 = vld [vmem:[#allocation3] sm:$0xff]
          %v1272 = vld [vmem:[#allocation3 + $0x8] sm:$0xff]
          %v1289 = vsel %vm1244, %v1058, %v1052
          %v1290 = vsel %vm1246, %v1064, %v1289
          %v1291 = vsel %vm1248, %v1070, %v1290
          %v1292 = vsel %vm1250, %v1076, %v1291
          %v1293 = vsel %vm1252, %v1082, %v1292
          %v1294 = vsel %vm1254, %v1088, %v1293
          %v1295 = vsel %vm1256, %v1094, %v1294
          %v1296 = vsel %vm1244, %v1106, %v1100
          %v1297 = vsel %vm1246, %v1112, %v1296
          %v1298 = vsel %vm1248, %v1118, %v1297
          %v1299 = vsel %vm1250, %v1124, %v1298
          %v1300 = vsel %vm1252, %v1130, %v1299
          %v1301 = vsel %vm1254, %v1136, %v1300
          %v1302 = vsel %vm1256, %v1142, %v1301
          %v1305 = vadd.f32 %v1271, %v1295
          %v1306 = vadd.f32 %v1272, %v1302
          %1307 = vst [vmem:[#allocation3] sm:$0xff] %v1305
          %1308 = vst [vmem:[#allocation3 + $0x8] sm:$0xff] %v1306
        $region144: #{tpu_custom_call.1} parent=127 // pred_fallthru
          _
        %p1309 = scmp.eq.s32.totalorder %s19, 1
        // Predicated region
        $region145: #{tpu_custom_call.1} parent=127 // pred_check
          %p1310 = pneg %p1309
        $region146: #{tpu_custom_call.1} parent=127 // pred_check_branch
          %1312 = sbr.rel (%p1310) target = $region148
        $region147: #{tpu_custom_call.1} parent=127 // pred_region
          %v1313 = vld [vmem:[#allocation2] sm:$0xff]
          %v1314 = vld [vmem:[#allocation2 + $0x8] sm:$0xff]
          %v1315 = vld [vmem:[#allocation3] sm:$0xff]
          %v1316 = vld [vmem:[#allocation3 + $0x8] sm:$0xff]
          %1319 = vrot.lane.b32.xlu0 %v1313, 96
          %v1320 = vpop.permute.xlu0 %1319
          %1321 = vrot.lane.b32.xlu0 %v1314, 96
          %v1322 = vpop.permute.xlu0 %1321
          %v1325 = vadd.f32 %v1313, %v1320
          %v1326 = vadd.f32 %v1314, %v1322
          %1329 = vrot.lane.b32.xlu0 %v1315, 96
          %v1330 = vpop.permute.xlu0 %1329
          %1331 = vrot.lane.b32.xlu0 %v1316, 96
          %v1332 = vpop.permute.xlu0 %1331
          %v1335 = vadd.f32 %v1315, %v1330
          %v1336 = vadd.f32 %v1316, %v1332
          %1337 = vrot.lane.b32.xlu0 %v1313, 64
          %v1338 = vpop.permute.xlu0 %1337
          %1339 = vrot.lane.b32.xlu0 %v1314, 64
          %v1340 = vpop.permute.xlu0 %1339
          %v1343 = vadd.f32 %v1325, %v1338
          %v1344 = vadd.f32 %v1326, %v1340
          %1345 = vrot.lane.b32.xlu0 %v1315, 64
          %v1346 = vpop.permute.xlu0 %1345
          %1347 = vrot.lane.b32.xlu0 %v1316, 64
          %v1348 = vpop.permute.xlu0 %1347
          %v1351 = vadd.f32 %v1335, %v1346
          %v1352 = vadd.f32 %v1336, %v1348
          %1353 = vrot.lane.b32.xlu0 %v1313, 32
          %v1354 = vpop.permute.xlu0 %1353
          %1355 = vrot.lane.b32.xlu0 %v1314, 32
          %v1356 = vpop.permute.xlu0 %1355
          %v1359 = vadd.f32 %v1343, %v1354
          %v1360 = vadd.f32 %v1344, %v1356
          %1361 = vrot.lane.b32.xlu0 %v1315, 32
          %v1362 = vpop.permute.xlu0 %1361
          %1363 = vrot.lane.b32.xlu0 %v1316, 32
          %v1364 = vpop.permute.xlu0 %1363
          %v1367 = vadd.f32 %v1351, %v1362
          %v1368 = vadd.f32 %v1352, %v1364
          %v1369 = vmul.f32 %v1359, %v1367
          %v1370 = vmul.f32 %v1360, %v1368
          %vm1371 = vcmask 261120
          %v1372 = vsel %vm1371, %v1369, 0.0
          %1373 = vadd.xlane.f32.xlu0 %v1372
          %v1374 = vpop.xlane.xlu0 %1373
          %v1375 = vsel %vm1371, %v1370, 0.0
          %1376 = vadd.xlane.f32.xlu0 %v1375
          %v1377 = vpop.xlane.xlu0 %1376
          %v1378 = vmul.f32 %v1359, %v1359
          %v1379 = vmul.f32 %v1360, %v1360
          %v1380 = vsel %vm1371, %v1378, 0.0
          %1381 = vadd.xlane.f32.xlu0 %v1380
          %v1382 = vpop.xlane.xlu0 %1381
          %v1383 = vsel %vm1371, %v1379, 0.0
          %1384 = vadd.xlane.f32.xlu0 %v1383
          %v1385 = vpop.xlane.xlu0 %1384
          %v1386 = vrsqrt.pop %v1382
          %v1387 = vmul.f32 %v1382, %v1386
          %vm1388 = vcmp.eq.f32.partialorder %v1382, inf
          %v1389 = vsel %vm1388, %v1382, %v1387
          %vm1390 = vcmp.eq.f32.partialorder %v1382, 0.0
          %v1391 = vand.u32 %v1382, 2147483648
          %v1392 = vsel %vm1390, %v1391, %v1389
          %v1393 = vrsqrt.pop %v1385
          %v1394 = vmul.f32 %v1385, %v1393
          %vm1395 = vcmp.eq.f32.partialorder %v1385, inf
          %v1396 = vsel %vm1395, %v1385, %v1394
          %vm1397 = vcmp.eq.f32.partialorder %v1385, 0.0
          %v1398 = vand.u32 %v1385, 2147483648
          %v1399 = vsel %vm1397, %v1398, %v1396
          %v1400 = vmul.f32 %v1367, %v1367
          %v1401 = vmul.f32 %v1368, %v1368
          %v1402 = vsel %vm1371, %v1400, 0.0
          %1403 = vadd.xlane.f32.xlu0 %v1402
          %v1404 = vpop.xlane.xlu0 %1403
          %v1405 = vsel %vm1371, %v1401, 0.0
          %1406 = vadd.xlane.f32.xlu0 %v1405
          %v1407 = vpop.xlane.xlu0 %1406
          %v1408 = vrsqrt.pop %v1404
          %v1409 = vmul.f32 %v1404, %v1408
          %vm1410 = vcmp.eq.f32.partialorder %v1404, inf
          %v1411 = vsel %vm1410, %v1404, %v1409
          %vm1412 = vcmp.eq.f32.partialorder %v1404, 0.0
          %v1413 = vand.u32 %v1404, 2147483648
          %v1414 = vsel %vm1412, %v1413, %v1411
          %v1415 = vrsqrt.pop %v1407
          %v1416 = vmul.f32 %v1407, %v1415
          %vm1417 = vcmp.eq.f32.partialorder %v1407, inf
          %v1418 = vsel %vm1417, %v1407, %v1416
          %vm1419 = vcmp.eq.f32.partialorder %v1407, 0.0
          %v1420 = vand.u32 %v1407, 2147483648
          %v1421 = vsel %vm1419, %v1420, %v1418
          %v1422 = vmax.f32 %v1392, 1e-08
          %v1423 = vmax.f32 %v1399, 1e-08
          %v1424 = vmax.f32 %v1414, 1e-08
          %v1425 = vmax.f32 %v1421, 1e-08
          %v1426 = vmul.f32 %v1422, %v1424
          %v1427 = vmul.f32 %v1423, %v1425
          %v1428 = vrcp.pop %v1426
          %v1429 = vmul.f32 %v1374, %v1428
          %v1430 = vrcp.pop %v1427
          %v1431 = vmul.f32 %v1377, %v1430
          %v1432 = vsub.f32 1.0, %v1429
          %v1433 = vsub.f32 1.0, %v1431
          %vm1434 = vcmask 7168
          %1435 = vst.msk [vmem:[%s570] sm:$0xff] %vm1434, %v1432
          %1436 = vst.msk [vmem:[%s570 + $0x8] sm:$0xff] %vm1434, %v1433
        $region148: #{tpu_custom_call.1} parent=127 // pred_fallthru
          _
        %s1437 = sand.u32 %s116, 1
        %s1438 = sand.u32 %s116, 1
        %s1439 = smul.addr %s1438, 16
        %s1440 = scalar_lea.vmem [#allocation6], %s1439
        // Predicated region
        $region149: #{tpu_custom_call.1} parent=127 // pred_check
          %p1441 = pneg %p126
        $region150: #{tpu_custom_call.1} parent=127 // pred_check_branch
          %1443 = sbr.rel (%p1441) target = $region152
        $region151: #{tpu_custom_call.1} parent=127 // pred_region
          %s1444 = smul.u32 2, %s18
          %s1445 = ssub.s32 3, %s1444
          %p1446 = scmp.lt.s32.totalorder %s1445, 2
          %s1447 = scalar_select %p1446, %s1445, 2
          %s1448 = smul.u32 128, %s1447
          %p1449 = scmp.ne.s32.totalorder 0, %s1448
          %s1450 = smul.addr %s1444, 8
          %s1451 = scalar_lea.vmem %s3, %s1450
          // Predicated region
          $region153: #{tpu_custom_call.1} parent=151 // pred_check
            %p1452 = pneg %p1449
          $region154: #{tpu_custom_call.1} parent=151 // pred_check_branch
            %1454 = sbr.rel (%p1452) target = $region156
          $region155: #{tpu_custom_call.1} parent=151 // pred_region
            // Predicated region
            $region157: #{tpu_custom_call.1} parent=155 // pred_check
              _
            $region158: #{tpu_custom_call.1} parent=155 // pred_check_branch
              %1456 = sbr.rel (0) target = $region160
            $region159: #{tpu_custom_call.1} parent=155 // pred_region
              // Predicated region
              $region179: #{tpu_custom_call.1} parent=159 // pred_check
                _
              $region180: #{tpu_custom_call.1} parent=159 // pred_check_branch
                %1507 = sbr.rel (0) target = $region182
              $region181: #{tpu_custom_call.1} parent=159 // pred_region
                %s1508 = sshrl.u32 %s1447, 1
                // While loop
                $region183: #{tpu_custom_call.1} parent=181 // loop_pre_header
                  _
                $region184: #{tpu_custom_call.1} parent=181 // loop_header
                  %s1510 = sphi 0, %s1512
                  %p1511 = scmp.ge.s32.totalorder %s1510, %s1508
                  %s1515 = sphi 0, %s1524
                  %s1516 = sphi %s1440, %s1527
                  %s1517 = sphi %s1451, %s1528
                $region185: #{tpu_custom_call.1} parent=181 // loop_header_branch
                  %1514 = sbr.rel (%p1511) target = $region189
                $region186: #{tpu_custom_call.1} parent=181 // loop_body
                  %v1518 = vld [vmem:[%s1516] sm:$0xff]
                  %1519 = vst [vmem:[%s1517] sm:$0xff] %v1518
                  %v1520 = vld [vmem:[%s1516 + $0x8] sm:$0xff]
                  %1521 = vst [vmem:[%s1517 + $0x8] sm:$0xff] %v1520
                  %s1522 = sadd.s32 1, %s1515
                  %p1523 = scmp.ge.s32.totalorder %s1522, %s1508
                  %s1524 = scalar_select %p1523, 0, %s1522
                  %s1525 = smul.u32 %s1524, 16
                  %s1526 = smul.u32 %s1524, 16
                  %s1527 = scalar_lea.vmem %s1440, %s1525 [#allocation6]
                  %s1528 = scalar_lea.vmem %s1451, %s1526
                $region187: #{tpu_custom_call.1} parent=181 // loop_footer
                  %s1512 = sadd.s32 %s1510, 1
                $region188: #{tpu_custom_call.1} parent=181 // loop_footer_branch
                  %1509 = sbr.rel target = $region184
                $region189: #{tpu_custom_call.1} parent=181 // loop_exit
                  _
                %s1529 = sshrl.u32 %s1447, 1
                %s1530 = sand.u32 %s1447, 1
                %s1531 = smul.u32 %s1529, 2
                %s1532 = smul.u32 8, %s1531
                %s1533 = scalar_lea.vmem %s1440, %s1532 [#allocation6]
                %s1534 = smul.u32 8, %s1531
                %s1535 = scalar_lea.vmem %s1451, %s1534
                // While loop
                $region190: #{tpu_custom_call.1} parent=181 // loop_pre_header
                  _
                $region191: #{tpu_custom_call.1} parent=181 // loop_header
                  %s1537 = sphi 0, %s1539
                  %p1538 = scmp.ge.s32.totalorder %s1537, %s1530
                  %s1542 = sphi 0, %s1549
                  %s1543 = sphi %s1533, %s1552
                  %s1544 = sphi %s1535, %s1553
                $region192: #{tpu_custom_call.1} parent=181 // loop_header_branch
                  %1541 = sbr.rel (%p1538) target = $region196
                $region193: #{tpu_custom_call.1} parent=181 // loop_body
                  %v1545 = vld [vmem:[%s1543] sm:$0xff]
                  %1546 = vst [vmem:[%s1544] sm:$0xff] %v1545
                  %s1547 = sadd.s32 1, %s1542
                  %p1548 = scmp.ge.s32.totalorder %s1547, %s1530
                  %s1549 = scalar_select %p1548, 0, %s1547
                  %s1550 = smul.u32 %s1549, 8
                  %s1551 = smul.u32 %s1549, 8
                  %s1552 = scalar_lea.vmem %s1533, %s1550 [#allocation6]
                  %s1553 = scalar_lea.vmem %s1535, %s1551
                $region194: #{tpu_custom_call.1} parent=181 // loop_footer
                  %s1539 = sadd.s32 %s1537, 1
                $region195: #{tpu_custom_call.1} parent=181 // loop_footer_branch
                  %1536 = sbr.rel target = $region191
                $region196: #{tpu_custom_call.1} parent=181 // loop_exit
                  _
              $region182: #{tpu_custom_call.1} parent=159 // pred_fallthru
                _
              // Predicated region
              $region197: #{tpu_custom_call.1} parent=159 // pred_check
                _
              $region198: #{tpu_custom_call.1} parent=159 // pred_check_branch
                %1555 = sbr.rel target = $region200
              $region199: #{tpu_custom_call.1} parent=159 // pred_region
                _
              $region200: #{tpu_custom_call.1} parent=159 // pred_fallthru
                _
            $region160: #{tpu_custom_call.1} parent=155 // pred_fallthru
              _
            // Predicated region
            $region161: #{tpu_custom_call.1} parent=155 // pred_check
              _
            $region162: #{tpu_custom_call.1} parent=155 // pred_check_branch
              %1458 = sbr.rel target = $region164
            $region163: #{tpu_custom_call.1} parent=155 // pred_region
              %s1460 = sshrl.u32 %s1447, 1
              // While loop
              $region165: #{tpu_custom_call.1} parent=163 // loop_pre_header
                _
              $region166: #{tpu_custom_call.1} parent=163 // loop_header
                %s1462 = sphi 0, %s1464
                %p1463 = scmp.ge.s32.totalorder %s1462, %s1460
                %s1467 = sphi 0, %s1476
                %s1468 = sphi %s1440, %s1479
                %s1469 = sphi %s1451, %s1480
              $region167: #{tpu_custom_call.1} parent=163 // loop_header_branch
                %1466 = sbr.rel (%p1463) target = $region171
              $region168: #{tpu_custom_call.1} parent=163 // loop_body
                %v1470 = vld [vmem:[%s1468] sm:$0xff]
                %1471 = vst [vmem:[%s1469] sm:$0xff] %v1470
                %v1472 = vld [vmem:[%s1468 + $0x8] sm:$0xff]
                %1473 = vst [vmem:[%s1469 + $0x8] sm:$0xff] %v1472
                %s1474 = sadd.s32 1, %s1467
                %p1475 = scmp.ge.s32.totalorder %s1474, %s1460
                %s1476 = scalar_select %p1475, 0, %s1474
                %s1477 = smul.u32 %s1476, 16
                %s1478 = smul.u32 %s1476, 16
                %s1479 = scalar_lea.vmem %s1440, %s1477 [#allocation6]
                %s1480 = scalar_lea.vmem %s1451, %s1478
              $region169: #{tpu_custom_call.1} parent=163 // loop_footer
                %s1464 = sadd.s32 %s1462, 1
              $region170: #{tpu_custom_call.1} parent=163 // loop_footer_branch
                %1461 = sbr.rel target = $region166
              $region171: #{tpu_custom_call.1} parent=163 // loop_exit
                _
              %s1481 = sshrl.u32 %s1447, 1
              %s1482 = sand.u32 %s1447, 1
              %s1483 = smul.u32 %s1481, 2
              %s1484 = smul.u32 8, %s1483
              %s1485 = scalar_lea.vmem %s1440, %s1484 [#allocation6]
              %s1486 = smul.u32 8, %s1483
              %s1487 = scalar_lea.vmem %s1451, %s1486
              // While loop
              $region172: #{tpu_custom_call.1} parent=163 // loop_pre_header
                _
              $region173: #{tpu_custom_call.1} parent=163 // loop_header
                %s1489 = sphi 0, %s1491
                %p1490 = scmp.ge.s32.totalorder %s1489, %s1482
                %s1494 = sphi 0, %s1501
                %s1495 = sphi %s1485, %s1504
                %s1496 = sphi %s1487, %s1505
              $region174: #{tpu_custom_call.1} parent=163 // loop_header_branch
                %1493 = sbr.rel (%p1490) target = $region178
              $region175: #{tpu_custom_call.1} parent=163 // loop_body
                %v1497 = vld [vmem:[%s1495] sm:$0xff]
                %1498 = vst [vmem:[%s1496] sm:$0xff] %v1497
                %s1499 = sadd.s32 1, %s1494
                %p1500 = scmp.ge.s32.totalorder %s1499, %s1482
                %s1501 = scalar_select %p1500, 0, %s1499
                %s1502 = smul.u32 %s1501, 8
                %s1503 = smul.u32 %s1501, 8
                %s1504 = scalar_lea.vmem %s1485, %s1502 [#allocation6]
                %s1505 = scalar_lea.vmem %s1487, %s1503
              $region176: #{tpu_custom_call.1} parent=163 // loop_footer
                %s1491 = sadd.s32 %s1489, 1
              $region177: #{tpu_custom_call.1} parent=163 // loop_footer_branch
                %1488 = sbr.rel target = $region173
              $region178: #{tpu_custom_call.1} parent=163 // loop_exit
                _
            $region164: #{tpu_custom_call.1} parent=155 // pred_fallthru
              _
          $region156: #{tpu_custom_call.1} parent=151 // pred_fallthru
            _
          %1556 = vnop
        $region152: #{tpu_custom_call.1} parent=127 // pred_fallthru
          _
      $region128: #{tpu_custom_call.1} parent=5 // pred_fallthru
        _
      %p1557 = scmp.le.s32.totalorder 2, %s9
      // Predicated region
      $region201: #{tpu_custom_call.1} parent=5 // pred_check
        %p1558 = pneg %p1557
      $region202: #{tpu_custom_call.1} parent=5 // pred_check_branch
        %1560 = sbr.rel (%p1558) target = $region204
      $region203: #{tpu_custom_call.1} parent=5 // pred_region
        %s1561 = ssub.s32 %s9, 2
        // Predicated region
        $region205: #{tpu_custom_call.1} parent=203 // pred_check
          %p1562 = pneg %p132
        $region206: #{tpu_custom_call.1} parent=203 // pred_check_branch
          %1564 = sbr.rel (%p1562) target = $region208
        $region207: #{tpu_custom_call.1} parent=203 // pred_region
          %s1565 = sand.u32 %s117, 1
          %s1566 = sand.u32 %s117, 1
          %s1567 = smul.addr %s1566, 16
          %s1568 = scalar_lea.vmem [#allocation6], %s1567
        $region208: #{tpu_custom_call.1} parent=203 // pred_fallthru
          _
      $region204: #{tpu_custom_call.1} parent=5 // pred_fallthru
        _
    $region6: #{tpu_custom_call.1} parent=1 // loop_footer
      %s13 = sadd.s32 1, %s9
    $region7: #{tpu_custom_call.1} parent=1 // loop_footer_branch
      %8 = sbr.rel target = $region3
    $region8: #{tpu_custom_call.1} parent=1 // loop_exit
      _

</llo_original>
